<compile_context>
chip_gen: v5e
topology: v5e:2x2
jax: 0.10.0
libtpu: 0.0.40
codegen_flags: <defaults>
</compile_context>

<pallas_src>
import jax
import jax.numpy as jnp
from jax import lax
from jax.experimental import pallas as pl
from jax.experimental.pallas import tpu as pltpu

# ---- static configuration (small shapes consistent with the module) --------
B = 2       # batch_size
S = 4       # sample_size
N = B * S   # flattened rows (B*S)
T = 8       # sequence length
F = 16      # n_features
H = 32      # hidden_dim
# num_layers=2, bidirectional=True (module defaults) are hard-wired below.

H2, H4, H6, H8 = 2 * H, 4 * H, 6 * H, 8 * H

# Row offsets inside the packed weight slab (all starts are 8-row aligned).
R_IH0 = 0                 # (2F, 8H)  layer-0 combined input->gates
R_HH0 = R_IH0 + 2 * F     # (2H, 8H)  layer-0 combined hidden->gates (block-diag)
R_IH1 = R_HH0 + H2        # (4H, 8H)  layer-1 combined input->gates (row-permuted)
R_HH1 = R_IH1 + H4        # (2H, 8H)  layer-1 combined hidden->gates (block-diag)
R_B0 = R_HH1 + H2         # (1, 8H)   layer-0 fused bias (b_ih + b_hh, both dirs)
R_B1 = R_B0 + 8           # (1, 8H)   layer-1 fused bias
R_TOT = R_B1 + 8          # 304 slab rows total


def shared_lstm_encoder_kernel(x_ref, w_ref, out_ref):
    f32 = jnp.float32
    x = x_ref[...]                                    # (T*N, 2F), step-major rows

    # Layer-0 weights only; layer-1 rows are loaded later (vreg pressure).
    w_ih0 = w_ref[R_IH0:R_IH0 + 2 * F, :]             # (2F, 8H)
    w_hh0 = w_ref[R_HH0:R_HH0 + H2, :]                # (2H, 8H), block-diag fwd/bwd
    b0 = w_ref[R_B0:R_B0 + 1, :]                      # (1, 8H)

    def cell(pre, hb, cb, w_hh):
        # pre = x_t @ W_ih + (b_ih + b_hh); g-gate columns are pre-scaled by 2.
        # hb/cb carry [fwd | bwd] halves (N, 2H); one 256-lane dot drives both
        # directions per serial step.
        if hb is None:                                # peeled first step: h = c = 0
            gates = pre
        else:
            gates = pre + jnp.dot(hb, w_hh, preferred_element_type=f32)
        a = jax.nn.sigmoid(gates)                     # single (N, 8H) EUP pass
        i_g = a[:, 0:H2]
        f_g = a[:, H2:H4]
        g_g = a[:, H4:H6] * 2.0 - 1.0                 # tanh(z) = 2*sigmoid(2z) - 1
        o_g = a[:, H6:H8]
        cb_new = i_g * g_g if cb is None else f_g * cb + i_g * g_g
        hb_new = o_g * jnp.tanh(cb_new)
        return hb_new, cb_new

    # ---- layer 0: one batched input projection + fused fwd/bwd recurrence ---
    g0 = jnp.dot(x, w_ih0, preferred_element_type=f32) + b0    # (T*N, 8H)

    hb, cb = None, None
    hs0 = []
    for s in range(T):                                # fully unrolled (static T)
        hb, cb = cell(g0[s * N:(s + 1) * N, :], hb, cb, w_hh0)
        hs0.append(hb)                                # [h0_f(t=s) | h0_b(t=T-1-s)]

    # ---- layer 1: batched projection over the whole layer-0 sequence --------
    # Combined layer-1 input at step s: u_s = [hs0[s] | hs0[T-1-s]]; the wrapper
    # row-permuted W_ih1 so this maps onto the correct fwd/bwd inputs.
    u = jnp.concatenate(
        [jnp.concatenate([hs0[s], hs0[T - 1 - s]], axis=1) for s in range(T)],
        axis=0)                                       # (T*N, 4H)

    w_ih1 = w_ref[R_IH1:R_IH1 + H4, :]                # deferred weight loads
    b1 = w_ref[R_B1:R_B1 + 1, :]
    g1 = jnp.dot(u, w_ih1, preferred_element_type=f32) + b1    # (T*N, 8H)

    w_hh1 = w_ref[R_HH1:R_HH1 + H2, :]
    hb, cb = None, None
    acc = jnp.zeros((N, H2), f32)
    for s in range(T):
        hb, cb = cell(g1[s * N:(s + 1) * N, :], hb, cb, w_hh1)
        acc = acc + hb           # accumulates fwd(t=s) | bwd(t=T-1-s) over all s

    # Mean over (time, direction): fold the two direction halves, scale once.
    out_ref[...] = (acc[:, 0:H] + acc[:, H:H2]) * (1.0 / (2.0 * T))


# ---- wrapper ----------------------------------------------------------------
def _prep_inputs(x, p):
    """Wrapper-side layout plumbing: step-major fwd|bwd input packing, gate/dir
    weight interleaving, bias fusion, g-gate pre-scaling, single weight slab."""
    f32 = jnp.float32

    # Step-major combined input: rows s*N+n, cols [x(t=s) | x(t=T-1-s)].
    xs = x.reshape(N, T, F)
    x_tm = jnp.transpose(xs, (1, 0, 2))                         # (T, N, F)
    x_comb = jnp.concatenate([x_tm, x_tm[::-1]], axis=-1).reshape(T * N, 2 * F)

    def interleave_w(w_f_t, w_b_t):
        # (rf,4H) + (rb,4H) transposed weights (cols [i,f,g,o]) -> (rf+rb, 8H)
        # with combined col layout [i_f,i_b,f_f,f_b,g_f,g_b,o_f,o_b];
        # fwd rows first, block-diagonal per direction.
        rf, rb = w_f_t.shape[0], w_b_t.shape[0]
        out = jnp.zeros((rf + rb, 4, 2, H), f32)
        out = out.at[:rf, :, 0, :].set(w_f_t.reshape(rf, 4, H))
        out = out.at[rf:, :, 1, :].set(w_b_t.reshape(rb, 4, H))
        return out.reshape(rf + rb, H8)

    def interleave_b(name_f, name_b):
        bf = (p[f"b_ih_{name_f}"] + p[f"b_hh_{name_f}"]).reshape(4, H)
        bb = (p[f"b_ih_{name_b}"] + p[f"b_hh_{name_b}"]).reshape(4, H)
        return jnp.stack([bf, bb], axis=1).reshape(1, H8)

    # layer 0: fwd gate columns see x(t=s), bwd columns see x(t=T-1-s).
    w_ih0 = interleave_w(jnp.transpose(p["w_ih_l0"]), jnp.transpose(p["w_ih_l0_r"]))
    w_hh0 = interleave_w(jnp.transpose(p["w_hh_l0"]), jnp.transpose(p["w_hh_l0_r"]))
    b0 = interleave_b("l0", "l0_r")

    # layer 1: kernel feeds u_s = [hs0[s] | hs0[T-1-s]], i.e. row blocks
    #   [h0_f(s), h0_b(T-1-s), h0_f(T-1-s), h0_b(s)]  (H rows each);
    # permute W_ih1 rows so u_s @ W hits the right direction/input halves.
    w1f_t = jnp.transpose(p["w_ih_l1"])        # (2H, 4H): rows [h0_f half | h0_b half]
    w1b_t = jnp.transpose(p["w_ih_l1_r"])      # (2H, 4H)
    wc = jnp.zeros((H4, 4, 2, H), f32)
    wc = wc.at[0 * H:1 * H, :, 0, :].set(w1f_t[0:H].reshape(H, 4, H))     # h0_f(s)     -> fwd
    wc = wc.at[1 * H:2 * H, :, 1, :].set(w1b_t[H:H2].reshape(H, 4, H))    # h0_b(T-1-s) -> bwd
    wc = wc.at[2 * H:3 * H, :, 1, :].set(w1b_t[0:H].reshape(H, 4, H))     # h0_f(T-1-s) -> bwd
    wc = wc.at[3 * H:4 * H, :, 0, :].set(w1f_t[H:H2].reshape(H, 4, H))    # h0_b(s)     -> fwd
    w_ih1 = wc.reshape(H4, H8)
    w_hh1 = interleave_w(jnp.transpose(p["w_hh_l1"]), jnp.transpose(p["w_hh_l1_r"]))
    b1 = interleave_b("l1", "l1_r")

    # Single-sigmoid gate trick: pre-scale the g-gate (tanh) columns by 2 so
    # the kernel needs only one sigmoid pass (tanh(z) = 2*sigmoid(2z) - 1).
    def scale_g(w):
        return w.at[:, H4:H6].multiply(2.0)

    w_ih0, w_hh0, b0 = scale_g(w_ih0), scale_g(w_hh0), scale_g(b0)
    w_ih1, w_hh1, b1 = scale_g(w_ih1), scale_g(w_hh1), scale_g(b1)

    pad = jnp.zeros((7, H8), f32)
    slab = jnp.concatenate([w_ih0, w_hh0, w_ih1, w_hh1, b0, pad, b1, pad], axis=0)
    assert slab.shape == (R_TOT, H8)
    return x_comb, slab


@jax.jit
def shared_lstm_encoder(x, params):
    """x: (B, S, T, F) -> (B, S, H), matching SharedLSTMEncoder.forward."""
    x_comb, slab = _prep_inputs(x, params)
    vmem = pl.BlockSpec(memory_space=pltpu.MemorySpace.VMEM)
    out = pl.pallas_call(
        shared_lstm_encoder_kernel,
        out_shape=jax.ShapeDtypeStruct((N, H), jnp.float32),
        in_specs=[vmem, vmem],
        out_specs=vmem,
    )(x_comb, slab)
    return out.reshape(B, S, H)


# ---- pure-JAX reference (mirrors the PyTorch forward, HIGHEST precision) ----
def reference(x, p):
    hp = lax.Precision.HIGHEST

    def run_dir(inp, w_ih, w_hh, b_ih, b_hh, reverse):
        n, t_len, _ = inp.shape
        h = jnp.zeros((n, H), jnp.float32)
        c = jnp.zeros((n, H), jnp.float32)
        outs = [None] * t_len
        ts = range(t_len - 1, -1, -1) if reverse else range(t_len)
        for t in ts:
            gates = (jnp.dot(inp[:, t, :], w_ih.T, precision=hp) + b_ih
                     + jnp.dot(h, w_hh.T, precision=hp) + b_hh)
            i_g = jax.nn.sigmoid(gates[:, 0 * H:1 * H])
            f_g = jax.nn.sigmoid(gates[:, 1 * H:2 * H])
            g_g = jnp.tanh(gates[:, 2 * H:3 * H])
            o_g = jax.nn.sigmoid(gates[:, 3 * H:4 * H])
            c = f_g * c + i_g * g_g
            h = o_g * jnp.tanh(c)
            outs[t] = h
        return jnp.stack(outs, axis=1)                       # (n, T, H)

    xs = x.reshape(N, T, F)
    l0 = jnp.concatenate([
        run_dir(xs, p["w_ih_l0"], p["w_hh_l0"], p["b_ih_l0"], p["b_hh_l0"], False),
        run_dir(xs, p["w_ih_l0_r"], p["w_hh_l0_r"], p["b_ih_l0_r"], p["b_hh_l0_r"], True),
    ], axis=-1)                                              # (N, T, 2H)
    l1 = jnp.concatenate([
        run_dir(l0, p["w_ih_l1"], p["w_hh_l1"], p["b_ih_l1"], p["b_hh_l1"], False),
        run_dir(l0, p["w_ih_l1_r"], p["w_hh_l1_r"], p["b_ih_l1_r"], p["b_hh_l1_r"], True),
    ], axis=-1)                                              # (N, T, 2H)
    out = l1.reshape(N, T, 2, H).mean(axis=(1, 2))
    return out.reshape(B, S, H)


# ---- deterministic parameter / input construction (PyTorch LSTM layout) -----
def make_params(key):
    bound = 1.0 / float(H) ** 0.5

    def lstm_dir(k, in_size):
        kw1, kw2, kb1, kb2 = jax.random.split(k, 4)
        u = lambda kk, shape: jax.random.uniform(kk, shape, jnp.float32, -bound, bound)
        return u(kw1, (4 * H, in_size)), u(kw2, (4 * H, H)), u(kb1, (4 * H,)), u(kb2, (4 * H,))

    names_and_in = [("l0", F), ("l0_r", F), ("l1", 2 * H), ("l1_r", 2 * H)]
    ks = jax.random.split(key, len(names_and_in))
    p = {}
    for k, (name, in_size) in zip(ks, names_and_in):
        w_ih, w_hh, b_ih, b_hh = lstm_dir(k, in_size)
        p[f"w_ih_{name}"] = w_ih
        p[f"w_hh_{name}"] = w_hh
        p[f"b_ih_{name}"] = b_ih
        p[f"b_hh_{name}"] = b_hh
    return p


if __name__ == "__main__":
    key = jax.random.PRNGKey(0)
    k_par, k_x = jax.random.split(key)
    params = make_params(k_par)
    x = jax.random.normal(k_x, (B, S, T, F), jnp.float32)

    out = shared_lstm_encoder(x, params)
    out = jax.block_until_ready(out)

    ref = reference(x, params)
    assert out.shape == (B, S, H)
    assert bool(jnp.all(jnp.isfinite(out)))
    max_err = float(jnp.max(jnp.abs(out - ref)))
    assert bool(jnp.allclose(out, ref, atol=2e-2, rtol=2e-2)), f"max abs err {max_err}"
    print("KERNEL_OK")
</pallas_src>

<mosaic_0001>
module attributes {stable_mosaic.version = 11 : i64} {
  func.func @shared_lstm_encoder_kernel(%arg0: memref<64x32xf32, #tpu.memory_space<vmem>>, %arg1: memref<304x256xf32, #tpu.memory_space<vmem>>, %arg2: memref<8x32xf32, #tpu.memory_space<vmem>>) attributes {dimension_semantics = [], scalar_prefetch = 0 : i64, scratch_operands = 0 : i64, tpu.core_type = #tpu.core_type<tc>} {
    %c0 = arith.constant 0 : index
    %c0_0 = arith.constant 0 : index
    %0 = vector.load %arg0[%c0, %c0_0] : memref<64x32xf32, #tpu.memory_space<vmem>>, vector<64x32xf32>
    %c0_1 = arith.constant 0 : index
    %c0_2 = arith.constant 0 : index
    %1 = vector.load %arg1[%c0_1, %c0_2] : memref<304x256xf32, #tpu.memory_space<vmem>>, vector<32x256xf32>
    %c32 = arith.constant 32 : index
    %c0_3 = arith.constant 0 : index
    %2 = vector.load %arg1[%c32, %c0_3] : memref<304x256xf32, #tpu.memory_space<vmem>>, vector<64x256xf32>
    %c288 = arith.constant 288 : index
    %c0_4 = arith.constant 0 : index
    %3 = vector.load %arg1[%c288, %c0_4] : memref<304x256xf32, #tpu.memory_space<vmem>>, vector<1x256xf32>
    %cst = arith.constant dense<0.000000e+00> : vector<64x256xf32>
    %4 = tpu.matmul %0, %1, %cst {dimension_numbers = #tpu.dot_dimension_numbers<[1], [0], [0], [1], [0, 0, 1, 1], [], []>} : vector<64x32xf32>, vector<32x256xf32>, vector<64x256xf32> -> vector<64x256xf32>
    %5 = vector.broadcast %3 : vector<1x256xf32> to vector<64x256xf32>
    %6 = arith.addf %4, %5 : vector<64x256xf32>
    %7 = vector.extract_strided_slice %6 {offsets = [0, 0], sizes = [8, 256], strides = [1, 1]} : vector<64x256xf32> to vector<8x256xf32>
    %8 = arith.negf %7 : vector<8x256xf32>
    %9 = math.exp %8 : vector<8x256xf32>
    %cst_5 = arith.constant 1.000000e+00 : f32
    %10 = vector.broadcast %cst_5 : f32 to vector<8x256xf32>
    %11 = arith.addf %10, %9 : vector<8x256xf32>
    %12 = arith.divf %10, %11 : vector<8x256xf32>
    %13 = vector.extract_strided_slice %12 {offsets = [0, 0], sizes = [8, 64], strides = [1, 1]} : vector<8x256xf32> to vector<8x64xf32>
    %14 = vector.extract_strided_slice %12 {offsets = [0, 128], sizes = [8, 64], strides = [1, 1]} : vector<8x256xf32> to vector<8x64xf32>
    %cst_6 = arith.constant 2.000000e+00 : f32
    %15 = vector.broadcast %cst_6 : f32 to vector<8x64xf32>
    %16 = arith.mulf %14, %15 : vector<8x64xf32>
    %cst_7 = arith.constant 1.000000e+00 : f32
    %17 = vector.broadcast %cst_7 : f32 to vector<8x64xf32>
    %18 = arith.subf %16, %17 : vector<8x64xf32>
    %19 = vector.extract_strided_slice %12 {offsets = [0, 192], sizes = [8, 64], strides = [1, 1]} : vector<8x256xf32> to vector<8x64xf32>
    %20 = arith.mulf %13, %18 : vector<8x64xf32>
    %21 = math.tanh %20 : vector<8x64xf32>
    %22 = arith.mulf %19, %21 : vector<8x64xf32>
    %23 = vector.extract_strided_slice %6 {offsets = [8, 0], sizes = [8, 256], strides = [1, 1]} : vector<64x256xf32> to vector<8x256xf32>
    %cst_8 = arith.constant dense<0.000000e+00> : vector<8x256xf32>
    %24 = tpu.matmul %22, %2, %cst_8 {dimension_numbers = #tpu.dot_dimension_numbers<[1], [0], [0], [1], [0, 0, 1, 1], [], []>} : vector<8x64xf32>, vector<64x256xf32>, vector<8x256xf32> -> vector<8x256xf32>
    %25 = arith.addf %23, %24 : vector<8x256xf32>
    %26 = arith.negf %25 : vector<8x256xf32>
    %27 = math.exp %26 : vector<8x256xf32>
    %cst_9 = arith.constant 1.000000e+00 : f32
    %28 = vector.broadcast %cst_9 : f32 to vector<8x256xf32>
    %29 = arith.addf %28, %27 : vector<8x256xf32>
    %30 = arith.divf %28, %29 : vector<8x256xf32>
    %31 = vector.extract_strided_slice %30 {offsets = [0, 0], sizes = [8, 64], strides = [1, 1]} : vector<8x256xf32> to vector<8x64xf32>
    %32 = vector.extract_strided_slice %30 {offsets = [0, 64], sizes = [8, 64], strides = [1, 1]} : vector<8x256xf32> to vector<8x64xf32>
    %33 = vector.extract_strided_slice %30 {offsets = [0, 128], sizes = [8, 64], strides = [1, 1]} : vector<8x256xf32> to vector<8x64xf32>
    %cst_10 = arith.constant 2.000000e+00 : f32
    %34 = vector.broadcast %cst_10 : f32 to vector<8x64xf32>
    %35 = arith.mulf %33, %34 : vector<8x64xf32>
    %cst_11 = arith.constant 1.000000e+00 : f32
    %36 = vector.broadcast %cst_11 : f32 to vector<8x64xf32>
    %37 = arith.subf %35, %36 : vector<8x64xf32>
    %38 = vector.extract_strided_slice %30 {offsets = [0, 192], sizes = [8, 64], strides = [1, 1]} : vector<8x256xf32> to vector<8x64xf32>
    %39 = arith.mulf %32, %20 : vector<8x64xf32>
    %40 = arith.mulf %31, %37 : vector<8x64xf32>
    %41 = arith.addf %39, %40 : vector<8x64xf32>
    %42 = math.tanh %41 : vector<8x64xf32>
    %43 = arith.mulf %38, %42 : vector<8x64xf32>
    %44 = vector.extract_strided_slice %6 {offsets = [16, 0], sizes = [8, 256], strides = [1, 1]} : vector<64x256xf32> to vector<8x256xf32>
    %cst_12 = arith.constant dense<0.000000e+00> : vector<8x256xf32>
    %45 = tpu.matmul %43, %2, %cst_12 {dimension_numbers = #tpu.dot_dimension_numbers<[1], [0], [0], [1], [0, 0, 1, 1], [], []>} : vector<8x64xf32>, vector<64x256xf32>, vector<8x256xf32> -> vector<8x256xf32>
    %46 = arith.addf %44, %45 : vector<8x256xf32>
    %47 = arith.negf %46 : vector<8x256xf32>
    %48 = math.exp %47 : vector<8x256xf32>
    %cst_13 = arith.constant 1.000000e+00 : f32
    %49 = vector.broadcast %cst_13 : f32 to vector<8x256xf32>
    %50 = arith.addf %49, %48 : vector<8x256xf32>
    %51 = arith.divf %49, %50 : vector<8x256xf32>
    %52 = vector.extract_strided_slice %51 {offsets = [0, 0], sizes = [8, 64], strides = [1, 1]} : vector<8x256xf32> to vector<8x64xf32>
    %53 = vector.extract_strided_slice %51 {offsets = [0, 64], sizes = [8, 64], strides = [1, 1]} : vector<8x256xf32> to vector<8x64xf32>
    %54 = vector.extract_strided_slice %51 {offsets = [0, 128], sizes = [8, 64], strides = [1, 1]} : vector<8x256xf32> to vector<8x64xf32>
    %cst_14 = arith.constant 2.000000e+00 : f32
    %55 = vector.broadcast %cst_14 : f32 to vector<8x64xf32>
    %56 = arith.mulf %54, %55 : vector<8x64xf32>
    %cst_15 = arith.constant 1.000000e+00 : f32
    %57 = vector.broadcast %cst_15 : f32 to vector<8x64xf32>
    %58 = arith.subf %56, %57 : vector<8x64xf32>
    %59 = vector.extract_strided_slice %51 {offsets = [0, 192], sizes = [8, 64], strides = [1, 1]} : vector<8x256xf32> to vector<8x64xf32>
    %60 = arith.mulf %53, %41 : vector<8x64xf32>
    %61 = arith.mulf %52, %58 : vector<8x64xf32>
    %62 = arith.addf %60, %61 : vector<8x64xf32>
    %63 = math.tanh %62 : vector<8x64xf32>
    %64 = arith.mulf %59, %63 : vector<8x64xf32>
    %65 = vector.extract_strided_slice %6 {offsets = [24, 0], sizes = [8, 256], strides = [1, 1]} : vector<64x256xf32> to vector<8x256xf32>
    %cst_16 = arith.constant dense<0.000000e+00> : vector<8x256xf32>
    %66 = tpu.matmul %64, %2, %cst_16 {dimension_numbers = #tpu.dot_dimension_numbers<[1], [0], [0], [1], [0, 0, 1, 1], [], []>} : vector<8x64xf32>, vector<64x256xf32>, vector<8x256xf32> -> vector<8x256xf32>
    %67 = arith.addf %65, %66 : vector<8x256xf32>
    %68 = arith.negf %67 : vector<8x256xf32>
    %69 = math.exp %68 : vector<8x256xf32>
    %cst_17 = arith.constant 1.000000e+00 : f32
    %70 = vector.broadcast %cst_17 : f32 to vector<8x256xf32>
    %71 = arith.addf %70, %69 : vector<8x256xf32>
    %72 = arith.divf %70, %71 : vector<8x256xf32>
    %73 = vector.extract_strided_slice %72 {offsets = [0, 0], sizes = [8, 64], strides = [1, 1]} : vector<8x256xf32> to vector<8x64xf32>
    %74 = vector.extract_strided_slice %72 {offsets = [0, 64], sizes = [8, 64], strides = [1, 1]} : vector<8x256xf32> to vector<8x64xf32>
    %75 = vector.extract_strided_slice %72 {offsets = [0, 128], sizes = [8, 64], strides = [1, 1]} : vector<8x256xf32> to vector<8x64xf32>
    %cst_18 = arith.constant 2.000000e+00 : f32
    %76 = vector.broadcast %cst_18 : f32 to vector<8x64xf32>
    %77 = arith.mulf %75, %76 : vector<8x64xf32>
    %cst_19 = arith.constant 1.000000e+00 : f32
    %78 = vector.broadcast %cst_19 : f32 to vector<8x64xf32>
    %79 = arith.subf %77, %78 : vector<8x64xf32>
    %80 = vector.extract_strided_slice %72 {offsets = [0, 192], sizes = [8, 64], strides = [1, 1]} : vector<8x256xf32> to vector<8x64xf32>
    %81 = arith.mulf %74, %62 : vector<8x64xf32>
    %82 = arith.mulf %73, %79 : vector<8x64xf32>
    %83 = arith.addf %81, %82 : vector<8x64xf32>
    %84 = math.tanh %83 : vector<8x64xf32>
    %85 = arith.mulf %80, %84 : vector<8x64xf32>
    %86 = vector.extract_strided_slice %6 {offsets = [32, 0], sizes = [8, 256], strides = [1, 1]} : vector<64x256xf32> to vector<8x256xf32>
    %cst_20 = arith.constant dense<0.000000e+00> : vector<8x256xf32>
    %87 = tpu.matmul %85, %2, %cst_20 {dimension_numbers = #tpu.dot_dimension_numbers<[1], [0], [0], [1], [0, 0, 1, 1], [], []>} : vector<8x64xf32>, vector<64x256xf32>, vector<8x256xf32> -> vector<8x256xf32>
    %88 = arith.addf %86, %87 : vector<8x256xf32>
    %89 = arith.negf %88 : vector<8x256xf32>
    %90 = math.exp %89 : vector<8x256xf32>
    %cst_21 = arith.constant 1.000000e+00 : f32
    %91 = vector.broadcast %cst_21 : f32 to vector<8x256xf32>
    %92 = arith.addf %91, %90 : vector<8x256xf32>
    %93 = arith.divf %91, %92 : vector<8x256xf32>
    %94 = vector.extract_strided_slice %93 {offsets = [0, 0], sizes = [8, 64], strides = [1, 1]} : vector<8x256xf32> to vector<8x64xf32>
    %95 = vector.extract_strided_slice %93 {offsets = [0, 64], sizes = [8, 64], strides = [1, 1]} : vector<8x256xf32> to vector<8x64xf32>
    %96 = vector.extract_strided_slice %93 {offsets = [0, 128], sizes = [8, 64], strides = [1, 1]} : vector<8x256xf32> to vector<8x64xf32>
    %cst_22 = arith.constant 2.000000e+00 : f32
    %97 = vector.broadcast %cst_22 : f32 to vector<8x64xf32>
    %98 = arith.mulf %96, %97 : vector<8x64xf32>
    %cst_23 = arith.constant 1.000000e+00 : f32
    %99 = vector.broadcast %cst_23 : f32 to vector<8x64xf32>
    %100 = arith.subf %98, %99 : vector<8x64xf32>
    %101 = vector.extract_strided_slice %93 {offsets = [0, 192], sizes = [8, 64], strides = [1, 1]} : vector<8x256xf32> to vector<8x64xf32>
    %102 = arith.mulf %95, %83 : vector<8x64xf32>
    %103 = arith.mulf %94, %100 : vector<8x64xf32>
    %104 = arith.addf %102, %103 : vector<8x64xf32>
    %105 = math.tanh %104 : vector<8x64xf32>
    %106 = arith.mulf %101, %105 : vector<8x64xf32>
    %107 = vector.extract_strided_slice %6 {offsets = [40, 0], sizes = [8, 256], strides = [1, 1]} : vector<64x256xf32> to vector<8x256xf32>
    %cst_24 = arith.constant dense<0.000000e+00> : vector<8x256xf32>
    %108 = tpu.matmul %106, %2, %cst_24 {dimension_numbers = #tpu.dot_dimension_numbers<[1], [0], [0], [1], [0, 0, 1, 1], [], []>} : vector<8x64xf32>, vector<64x256xf32>, vector<8x256xf32> -> vector<8x256xf32>
    %109 = arith.addf %107, %108 : vector<8x256xf32>
    %110 = arith.negf %109 : vector<8x256xf32>
    %111 = math.exp %110 : vector<8x256xf32>
    %cst_25 = arith.constant 1.000000e+00 : f32
    %112 = vector.broadcast %cst_25 : f32 to vector<8x256xf32>
    %113 = arith.addf %112, %111 : vector<8x256xf32>
    %114 = arith.divf %112, %113 : vector<8x256xf32>
    %115 = vector.extract_strided_slice %114 {offsets = [0, 0], sizes = [8, 64], strides = [1, 1]} : vector<8x256xf32> to vector<8x64xf32>
    %116 = vector.extract_strided_slice %114 {offsets = [0, 64], sizes = [8, 64], strides = [1, 1]} : vector<8x256xf32> to vector<8x64xf32>
    %117 = vector.extract_strided_slice %114 {offsets = [0, 128], sizes = [8, 64], strides = [1, 1]} : vector<8x256xf32> to vector<8x64xf32>
    %cst_26 = arith.constant 2.000000e+00 : f32
    %118 = vector.broadcast %cst_26 : f32 to vector<8x64xf32>
    %119 = arith.mulf %117, %118 : vector<8x64xf32>
    %cst_27 = arith.constant 1.000000e+00 : f32
    %120 = vector.broadcast %cst_27 : f32 to vector<8x64xf32>
    %121 = arith.subf %119, %120 : vector<8x64xf32>
    %122 = vector.extract_strided_slice %114 {offsets = [0, 192], sizes = [8, 64], strides = [1, 1]} : vector<8x256xf32> to vector<8x64xf32>
    %123 = arith.mulf %116, %104 : vector<8x64xf32>
    %124 = arith.mulf %115, %121 : vector<8x64xf32>
    %125 = arith.addf %123, %124 : vector<8x64xf32>
    %126 = math.tanh %125 : vector<8x64xf32>
    %127 = arith.mulf %122, %126 : vector<8x64xf32>
    %128 = vector.extract_strided_slice %6 {offsets = [48, 0], sizes = [8, 256], strides = [1, 1]} : vector<64x256xf32> to vector<8x256xf32>
    %cst_28 = arith.constant dense<0.000000e+00> : vector<8x256xf32>
    %129 = tpu.matmul %127, %2, %cst_28 {dimension_numbers = #tpu.dot_dimension_numbers<[1], [0], [0], [1], [0, 0, 1, 1], [], []>} : vector<8x64xf32>, vector<64x256xf32>, vector<8x256xf32> -> vector<8x256xf32>
    %130 = arith.addf %128, %129 : vector<8x256xf32>
    %131 = arith.negf %130 : vector<8x256xf32>
    %132 = math.exp %131 : vector<8x256xf32>
    %cst_29 = arith.constant 1.000000e+00 : f32
    %133 = vector.broadcast %cst_29 : f32 to vector<8x256xf32>
    %134 = arith.addf %133, %132 : vector<8x256xf32>
    %135 = arith.divf %133, %134 : vector<8x256xf32>
    %136 = vector.extract_strided_slice %135 {offsets = [0, 0], sizes = [8, 64], strides = [1, 1]} : vector<8x256xf32> to vector<8x64xf32>
    %137 = vector.extract_strided_slice %135 {offsets = [0, 64], sizes = [8, 64], strides = [1, 1]} : vector<8x256xf32> to vector<8x64xf32>
    %138 = vector.extract_strided_slice %135 {offsets = [0, 128], sizes = [8, 64], strides = [1, 1]} : vector<8x256xf32> to vector<8x64xf32>
    %cst_30 = arith.constant 2.000000e+00 : f32
    %139 = vector.broadcast %cst_30 : f32 to vector<8x64xf32>
    %140 = arith.mulf %138, %139 : vector<8x64xf32>
    %cst_31 = arith.constant 1.000000e+00 : f32
    %141 = vector.broadcast %cst_31 : f32 to vector<8x64xf32>
    %142 = arith.subf %140, %141 : vector<8x64xf32>
    %143 = vector.extract_strided_slice %135 {offsets = [0, 192], sizes = [8, 64], strides = [1, 1]} : vector<8x256xf32> to vector<8x64xf32>
    %144 = arith.mulf %137, %125 : vector<8x64xf32>
    %145 = arith.mulf %136, %142 : vector<8x64xf32>
    %146 = arith.addf %144, %145 : vector<8x64xf32>
    %147 = math.tanh %146 : vector<8x64xf32>
    %148 = arith.mulf %143, %147 : vector<8x64xf32>
    %149 = vector.extract_strided_slice %6 {offsets = [56, 0], sizes = [8, 256], strides = [1, 1]} : vector<64x256xf32> to vector<8x256xf32>
    %cst_32 = arith.constant dense<0.000000e+00> : vector<8x256xf32>
    %150 = tpu.matmul %148, %2, %cst_32 {dimension_numbers = #tpu.dot_dimension_numbers<[1], [0], [0], [1], [0, 0, 1, 1], [], []>} : vector<8x64xf32>, vector<64x256xf32>, vector<8x256xf32> -> vector<8x256xf32>
    %151 = arith.addf %149, %150 : vector<8x256xf32>
    %152 = arith.negf %151 : vector<8x256xf32>
    %153 = math.exp %152 : vector<8x256xf32>
    %cst_33 = arith.constant 1.000000e+00 : f32
    %154 = vector.broadcast %cst_33 : f32 to vector<8x256xf32>
    %155 = arith.addf %154, %153 : vector<8x256xf32>
    %156 = arith.divf %154, %155 : vector<8x256xf32>
    %157 = vector.extract_strided_slice %156 {offsets = [0, 0], sizes = [8, 64], strides = [1, 1]} : vector<8x256xf32> to vector<8x64xf32>
    %158 = vector.extract_strided_slice %156 {offsets = [0, 64], sizes = [8, 64], strides = [1, 1]} : vector<8x256xf32> to vector<8x64xf32>
    %159 = vector.extract_strided_slice %156 {offsets = [0, 128], sizes = [8, 64], strides = [1, 1]} : vector<8x256xf32> to vector<8x64xf32>
    %cst_34 = arith.constant 2.000000e+00 : f32
    %160 = vector.broadcast %cst_34 : f32 to vector<8x64xf32>
    %161 = arith.mulf %159, %160 : vector<8x64xf32>
    %cst_35 = arith.constant 1.000000e+00 : f32
    %162 = vector.broadcast %cst_35 : f32 to vector<8x64xf32>
    %163 = arith.subf %161, %162 : vector<8x64xf32>
    %164 = vector.extract_strided_slice %156 {offsets = [0, 192], sizes = [8, 64], strides = [1, 1]} : vector<8x256xf32> to vector<8x64xf32>
    %165 = arith.mulf %158, %146 : vector<8x64xf32>
    %166 = arith.mulf %157, %163 : vector<8x64xf32>
    %167 = arith.addf %165, %166 : vector<8x64xf32>
    %168 = math.tanh %167 : vector<8x64xf32>
    %169 = arith.mulf %164, %168 : vector<8x64xf32>
    %170 = tpu.concatenate %22, %169 in 1 : vector<8x64xf32>, vector<8x64xf32> -> vector<8x128xf32>
    %171 = tpu.concatenate %43, %148 in 1 : vector<8x64xf32>, vector<8x64xf32> -> vector<8x128xf32>
    %172 = tpu.concatenate %64, %127 in 1 : vector<8x64xf32>, vector<8x64xf32> -> vector<8x128xf32>
    %173 = tpu.concatenate %85, %106 in 1 : vector<8x64xf32>, vector<8x64xf32> -> vector<8x128xf32>
    %174 = tpu.concatenate %106, %85 in 1 : vector<8x64xf32>, vector<8x64xf32> -> vector<8x128xf32>
    %175 = tpu.concatenate %127, %64 in 1 : vector<8x64xf32>, vector<8x64xf32> -> vector<8x128xf32>
    %176 = tpu.concatenate %148, %43 in 1 : vector<8x64xf32>, vector<8x64xf32> -> vector<8x128xf32>
    %177 = tpu.concatenate %169, %22 in 1 : vector<8x64xf32>, vector<8x64xf32> -> vector<8x128xf32>
    %178 = tpu.concatenate %170, %171, %172, %173, %174, %175, %176, %177 in 0 : vector<8x128xf32>, vector<8x128xf32>, vector<8x128xf32>, vector<8x128xf32>, vector<8x128xf32>, vector<8x128xf32>, vector<8x128xf32>, vector<8x128xf32> -> vector<64x128xf32>
    %c96 = arith.constant 96 : index
    %c0_36 = arith.constant 0 : index
    %179 = vector.load %arg1[%c96, %c0_36] : memref<304x256xf32, #tpu.memory_space<vmem>>, vector<128x256xf32>
    %c296 = arith.constant 296 : index
    %c0_37 = arith.constant 0 : index
    %180 = vector.load %arg1[%c296, %c0_37] : memref<304x256xf32, #tpu.memory_space<vmem>>, vector<1x256xf32>
    %cst_38 = arith.constant dense<0.000000e+00> : vector<64x256xf32>
    %181 = tpu.matmul %178, %179, %cst_38 {dimension_numbers = #tpu.dot_dimension_numbers<[1], [0], [0], [1], [0, 0, 1, 1], [], []>} : vector<64x128xf32>, vector<128x256xf32>, vector<64x256xf32> -> vector<64x256xf32>
    %182 = vector.broadcast %180 : vector<1x256xf32> to vector<64x256xf32>
    %183 = arith.addf %181, %182 : vector<64x256xf32>
    %c224 = arith.constant 224 : index
    %c0_39 = arith.constant 0 : index
    %184 = vector.load %arg1[%c224, %c0_39] : memref<304x256xf32, #tpu.memory_space<vmem>>, vector<64x256xf32>
    %cst_40 = arith.constant 0.000000e+00 : f32
    %185 = vector.broadcast %cst_40 : f32 to vector<8x64xf32>
    %186 = vector.extract_strided_slice %183 {offsets = [0, 0], sizes = [8, 256], strides = [1, 1]} : vector<64x256xf32> to vector<8x256xf32>
    %187 = arith.negf %186 : vector<8x256xf32>
    %188 = math.exp %187 : vector<8x256xf32>
    %cst_41 = arith.constant 1.000000e+00 : f32
    %189 = vector.broadcast %cst_41 : f32 to vector<8x256xf32>
    %190 = arith.addf %189, %188 : vector<8x256xf32>
    %191 = arith.divf %189, %190 : vector<8x256xf32>
    %192 = vector.extract_strided_slice %191 {offsets = [0, 0], sizes = [8, 64], strides = [1, 1]} : vector<8x256xf32> to vector<8x64xf32>
    %193 = vector.extract_strided_slice %191 {offsets = [0, 128], sizes = [8, 64], strides = [1, 1]} : vector<8x256xf32> to vector<8x64xf32>
    %cst_42 = arith.constant 2.000000e+00 : f32
    %194 = vector.broadcast %cst_42 : f32 to vector<8x64xf32>
    %195 = arith.mulf %193, %194 : vector<8x64xf32>
    %cst_43 = arith.constant 1.000000e+00 : f32
    %196 = vector.broadcast %cst_43 : f32 to vector<8x64xf32>
    %197 = arith.subf %195, %196 : vector<8x64xf32>
    %198 = vector.extract_strided_slice %191 {offsets = [0, 192], sizes = [8, 64], strides = [1, 1]} : vector<8x256xf32> to vector<8x64xf32>
    %199 = arith.mulf %192, %197 : vector<8x64xf32>
    %200 = math.tanh %199 : vector<8x64xf32>
    %201 = arith.mulf %198, %200 : vector<8x64xf32>
    %202 = arith.addf %185, %201 : vector<8x64xf32>
    %203 = vector.extract_strided_slice %183 {offsets = [8, 0], sizes = [8, 256], strides = [1, 1]} : vector<64x256xf32> to vector<8x256xf32>
    %cst_44 = arith.constant dense<0.000000e+00> : vector<8x256xf32>
    %204 = tpu.matmul %201, %184, %cst_44 {dimension_numbers = #tpu.dot_dimension_numbers<[1], [0], [0], [1], [0, 0, 1, 1], [], []>} : vector<8x64xf32>, vector<64x256xf32>, vector<8x256xf32> -> vector<8x256xf32>
    %205 = arith.addf %203, %204 : vector<8x256xf32>
    %206 = arith.negf %205 : vector<8x256xf32>
    %207 = math.exp %206 : vector<8x256xf32>
    %cst_45 = arith.constant 1.000000e+00 : f32
    %208 = vector.broadcast %cst_45 : f32 to vector<8x256xf32>
    %209 = arith.addf %208, %207 : vector<8x256xf32>
    %210 = arith.divf %208, %209 : vector<8x256xf32>
    %211 = vector.extract_strided_slice %210 {offsets = [0, 0], sizes = [8, 64], strides = [1, 1]} : vector<8x256xf32> to vector<8x64xf32>
    %212 = vector.extract_strided_slice %210 {offsets = [0, 64], sizes = [8, 64], strides = [1, 1]} : vector<8x256xf32> to vector<8x64xf32>
    %213 = vector.extract_strided_slice %210 {offsets = [0, 128], sizes = [8, 64], strides = [1, 1]} : vector<8x256xf32> to vector<8x64xf32>
    %cst_46 = arith.constant 2.000000e+00 : f32
    %214 = vector.broadcast %cst_46 : f32 to vector<8x64xf32>
    %215 = arith.mulf %213, %214 : vector<8x64xf32>
    %cst_47 = arith.constant 1.000000e+00 : f32
    %216 = vector.broadcast %cst_47 : f32 to vector<8x64xf32>
    %217 = arith.subf %215, %216 : vector<8x64xf32>
    %218 = vector.extract_strided_slice %210 {offsets = [0, 192], sizes = [8, 64], strides = [1, 1]} : vector<8x256xf32> to vector<8x64xf32>
    %219 = arith.mulf %212, %199 : vector<8x64xf32>
    %220 = arith.mulf %211, %217 : vector<8x64xf32>
    %221 = arith.addf %219, %220 : vector<8x64xf32>
    %222 = math.tanh %221 : vector<8x64xf32>
    %223 = arith.mulf %218, %222 : vector<8x64xf32>
    %224 = arith.addf %202, %223 : vector<8x64xf32>
    %225 = vector.extract_strided_slice %183 {offsets = [16, 0], sizes = [8, 256], strides = [1, 1]} : vector<64x256xf32> to vector<8x256xf32>
    %cst_48 = arith.constant dense<0.000000e+00> : vector<8x256xf32>
    %226 = tpu.matmul %223, %184, %cst_48 {dimension_numbers = #tpu.dot_dimension_numbers<[1], [0], [0], [1], [0, 0, 1, 1], [], []>} : vector<8x64xf32>, vector<64x256xf32>, vector<8x256xf32> -> vector<8x256xf32>
    %227 = arith.addf %225, %226 : vector<8x256xf32>
    %228 = arith.negf %227 : vector<8x256xf32>
    %229 = math.exp %228 : vector<8x256xf32>
    %cst_49 = arith.constant 1.000000e+00 : f32
    %230 = vector.broadcast %cst_49 : f32 to vector<8x256xf32>
    %231 = arith.addf %230, %229 : vector<8x256xf32>
    %232 = arith.divf %230, %231 : vector<8x256xf32>
    %233 = vector.extract_strided_slice %232 {offsets = [0, 0], sizes = [8, 64], strides = [1, 1]} : vector<8x256xf32> to vector<8x64xf32>
    %234 = vector.extract_strided_slice %232 {offsets = [0, 64], sizes = [8, 64], strides = [1, 1]} : vector<8x256xf32> to vector<8x64xf32>
    %235 = vector.extract_strided_slice %232 {offsets = [0, 128], sizes = [8, 64], strides = [1, 1]} : vector<8x256xf32> to vector<8x64xf32>
    %cst_50 = arith.constant 2.000000e+00 : f32
    %236 = vector.broadcast %cst_50 : f32 to vector<8x64xf32>
    %237 = arith.mulf %235, %236 : vector<8x64xf32>
    %cst_51 = arith.constant 1.000000e+00 : f32
    %238 = vector.broadcast %cst_51 : f32 to vector<8x64xf32>
    %239 = arith.subf %237, %238 : vector<8x64xf32>
    %240 = vector.extract_strided_slice %232 {offsets = [0, 192], sizes = [8, 64], strides = [1, 1]} : vector<8x256xf32> to vector<8x64xf32>
    %241 = arith.mulf %234, %221 : vector<8x64xf32>
    %242 = arith.mulf %233, %239 : vector<8x64xf32>
    %243 = arith.addf %241, %242 : vector<8x64xf32>
    %244 = math.tanh %243 : vector<8x64xf32>
    %245 = arith.mulf %240, %244 : vector<8x64xf32>
    %246 = arith.addf %224, %245 : vector<8x64xf32>
    %247 = vector.extract_strided_slice %183 {offsets = [24, 0], sizes = [8, 256], strides = [1, 1]} : vector<64x256xf32> to vector<8x256xf32>
    %cst_52 = arith.constant dense<0.000000e+00> : vector<8x256xf32>
    %248 = tpu.matmul %245, %184, %cst_52 {dimension_numbers = #tpu.dot_dimension_numbers<[1], [0], [0], [1], [0, 0, 1, 1], [], []>} : vector<8x64xf32>, vector<64x256xf32>, vector<8x256xf32> -> vector<8x256xf32>
    %249 = arith.addf %247, %248 : vector<8x256xf32>
    %250 = arith.negf %249 : vector<8x256xf32>
    %251 = math.exp %250 : vector<8x256xf32>
    %cst_53 = arith.constant 1.000000e+00 : f32
    %252 = vector.broadcast %cst_53 : f32 to vector<8x256xf32>
    %253 = arith.addf %252, %251 : vector<8x256xf32>
    %254 = arith.divf %252, %253 : vector<8x256xf32>
    %255 = vector.extract_strided_slice %254 {offsets = [0, 0], sizes = [8, 64], strides = [1, 1]} : vector<8x256xf32> to vector<8x64xf32>
    %256 = vector.extract_strided_slice %254 {offsets = [0, 64], sizes = [8, 64], strides = [1, 1]} : vector<8x256xf32> to vector<8x64xf32>
    %257 = vector.extract_strided_slice %254 {offsets = [0, 128], sizes = [8, 64], strides = [1, 1]} : vector<8x256xf32> to vector<8x64xf32>
    %cst_54 = arith.constant 2.000000e+00 : f32
    %258 = vector.broadcast %cst_54 : f32 to vector<8x64xf32>
    %259 = arith.mulf %257, %258 : vector<8x64xf32>
    %cst_55 = arith.constant 1.000000e+00 : f32
    %260 = vector.broadcast %cst_55 : f32 to vector<8x64xf32>
    %261 = arith.subf %259, %260 : vector<8x64xf32>
    %262 = vector.extract_strided_slice %254 {offsets = [0, 192], sizes = [8, 64], strides = [1, 1]} : vector<8x256xf32> to vector<8x64xf32>
    %263 = arith.mulf %256, %243 : vector<8x64xf32>
    %264 = arith.mulf %255, %261 : vector<8x64xf32>
    %265 = arith.addf %263, %264 : vector<8x64xf32>
    %266 = math.tanh %265 : vector<8x64xf32>
    %267 = arith.mulf %262, %266 : vector<8x64xf32>
    %268 = arith.addf %246, %267 : vector<8x64xf32>
    %269 = vector.extract_strided_slice %183 {offsets = [32, 0], sizes = [8, 256], strides = [1, 1]} : vector<64x256xf32> to vector<8x256xf32>
    %cst_56 = arith.constant dense<0.000000e+00> : vector<8x256xf32>
    %270 = tpu.matmul %267, %184, %cst_56 {dimension_numbers = #tpu.dot_dimension_numbers<[1], [0], [0], [1], [0, 0, 1, 1], [], []>} : vector<8x64xf32>, vector<64x256xf32>, vector<8x256xf32> -> vector<8x256xf32>
    %271 = arith.addf %269, %270 : vector<8x256xf32>
    %272 = arith.negf %271 : vector<8x256xf32>
    %273 = math.exp %272 : vector<8x256xf32>
    %cst_57 = arith.constant 1.000000e+00 : f32
    %274 = vector.broadcast %cst_57 : f32 to vector<8x256xf32>
    %275 = arith.addf %274, %273 : vector<8x256xf32>
    %276 = arith.divf %274, %275 : vector<8x256xf32>
    %277 = vector.extract_strided_slice %276 {offsets = [0, 0], sizes = [8, 64], strides = [1, 1]} : vector<8x256xf32> to vector<8x64xf32>
    %278 = vector.extract_strided_slice %276 {offsets = [0, 64], sizes = [8, 64], strides = [1, 1]} : vector<8x256xf32> to vector<8x64xf32>
    %279 = vector.extract_strided_slice %276 {offsets = [0, 128], sizes = [8, 64], strides = [1, 1]} : vector<8x256xf32> to vector<8x64xf32>
    %cst_58 = arith.constant 2.000000e+00 : f32
    %280 = vector.broadcast %cst_58 : f32 to vector<8x64xf32>
    %281 = arith.mulf %279, %280 : vector<8x64xf32>
    %cst_59 = arith.constant 1.000000e+00 : f32
    %282 = vector.broadcast %cst_59 : f32 to vector<8x64xf32>
    %283 = arith.subf %281, %282 : vector<8x64xf32>
    %284 = vector.extract_strided_slice %276 {offsets = [0, 192], sizes = [8, 64], strides = [1, 1]} : vector<8x256xf32> to vector<8x64xf32>
    %285 = arith.mulf %278, %265 : vector<8x64xf32>
    %286 = arith.mulf %277, %283 : vector<8x64xf32>
    %287 = arith.addf %285, %286 : vector<8x64xf32>
    %288 = math.tanh %287 : vector<8x64xf32>
    %289 = arith.mulf %284, %288 : vector<8x64xf32>
    %290 = arith.addf %268, %289 : vector<8x64xf32>
    %291 = vector.extract_strided_slice %183 {offsets = [40, 0], sizes = [8, 256], strides = [1, 1]} : vector<64x256xf32> to vector<8x256xf32>
    %cst_60 = arith.constant dense<0.000000e+00> : vector<8x256xf32>
    %292 = tpu.matmul %289, %184, %cst_60 {dimension_numbers = #tpu.dot_dimension_numbers<[1], [0], [0], [1], [0, 0, 1, 1], [], []>} : vector<8x64xf32>, vector<64x256xf32>, vector<8x256xf32> -> vector<8x256xf32>
    %293 = arith.addf %291, %292 : vector<8x256xf32>
    %294 = arith.negf %293 : vector<8x256xf32>
    %295 = math.exp %294 : vector<8x256xf32>
    %cst_61 = arith.constant 1.000000e+00 : f32
    %296 = vector.broadcast %cst_61 : f32 to vector<8x256xf32>
    %297 = arith.addf %296, %295 : vector<8x256xf32>
    %298 = arith.divf %296, %297 : vector<8x256xf32>
    %299 = vector.extract_strided_slice %298 {offsets = [0, 0], sizes = [8, 64], strides = [1, 1]} : vector<8x256xf32> to vector<8x64xf32>
    %300 = vector.extract_strided_slice %298 {offsets = [0, 64], sizes = [8, 64], strides = [1, 1]} : vector<8x256xf32> to vector<8x64xf32>
    %301 = vector.extract_strided_slice %298 {offsets = [0, 128], sizes = [8, 64], strides = [1, 1]} : vector<8x256xf32> to vector<8x64xf32>
    %cst_62 = arith.constant 2.000000e+00 : f32
    %302 = vector.broadcast %cst_62 : f32 to vector<8x64xf32>
    %303 = arith.mulf %301, %302 : vector<8x64xf32>
    %cst_63 = arith.constant 1.000000e+00 : f32
    %304 = vector.broadcast %cst_63 : f32 to vector<8x64xf32>
    %305 = arith.subf %303, %304 : vector<8x64xf32>
    %306 = vector.extract_strided_slice %298 {offsets = [0, 192], sizes = [8, 64], strides = [1, 1]} : vector<8x256xf32> to vector<8x64xf32>
    %307 = arith.mulf %300, %287 : vector<8x64xf32>
    %308 = arith.mulf %299, %305 : vector<8x64xf32>
    %309 = arith.addf %307, %308 : vector<8x64xf32>
    %310 = math.tanh %309 : vector<8x64xf32>
    %311 = arith.mulf %306, %310 : vector<8x64xf32>
    %312 = arith.addf %290, %311 : vector<8x64xf32>
    %313 = vector.extract_strided_slice %183 {offsets = [48, 0], sizes = [8, 256], strides = [1, 1]} : vector<64x256xf32> to vector<8x256xf32>
    %cst_64 = arith.constant dense<0.000000e+00> : vector<8x256xf32>
    %314 = tpu.matmul %311, %184, %cst_64 {dimension_numbers = #tpu.dot_dimension_numbers<[1], [0], [0], [1], [0, 0, 1, 1], [], []>} : vector<8x64xf32>, vector<64x256xf32>, vector<8x256xf32> -> vector<8x256xf32>
    %315 = arith.addf %313, %314 : vector<8x256xf32>
    %316 = arith.negf %315 : vector<8x256xf32>
    %317 = math.exp %316 : vector<8x256xf32>
    %cst_65 = arith.constant 1.000000e+00 : f32
    %318 = vector.broadcast %cst_65 : f32 to vector<8x256xf32>
    %319 = arith.addf %318, %317 : vector<8x256xf32>
    %320 = arith.divf %318, %319 : vector<8x256xf32>
    %321 = vector.extract_strided_slice %320 {offsets = [0, 0], sizes = [8, 64], strides = [1, 1]} : vector<8x256xf32> to vector<8x64xf32>
    %322 = vector.extract_strided_slice %320 {offsets = [0, 64], sizes = [8, 64], strides = [1, 1]} : vector<8x256xf32> to vector<8x64xf32>
    %323 = vector.extract_strided_slice %320 {offsets = [0, 128], sizes = [8, 64], strides = [1, 1]} : vector<8x256xf32> to vector<8x64xf32>
    %cst_66 = arith.constant 2.000000e+00 : f32
    %324 = vector.broadcast %cst_66 : f32 to vector<8x64xf32>
    %325 = arith.mulf %323, %324 : vector<8x64xf32>
    %cst_67 = arith.constant 1.000000e+00 : f32
    %326 = vector.broadcast %cst_67 : f32 to vector<8x64xf32>
    %327 = arith.subf %325, %326 : vector<8x64xf32>
    %328 = vector.extract_strided_slice %320 {offsets = [0, 192], sizes = [8, 64], strides = [1, 1]} : vector<8x256xf32> to vector<8x64xf32>
    %329 = arith.mulf %322, %309 : vector<8x64xf32>
    %330 = arith.mulf %321, %327 : vector<8x64xf32>
    %331 = arith.addf %329, %330 : vector<8x64xf32>
    %332 = math.tanh %331 : vector<8x64xf32>
    %333 = arith.mulf %328, %332 : vector<8x64xf32>
    %334 = arith.addf %312, %333 : vector<8x64xf32>
    %335 = vector.extract_strided_slice %183 {offsets = [56, 0], sizes = [8, 256], strides = [1, 1]} : vector<64x256xf32> to vector<8x256xf32>
    %cst_68 = arith.constant dense<0.000000e+00> : vector<8x256xf32>
    %336 = tpu.matmul %333, %184, %cst_68 {dimension_numbers = #tpu.dot_dimension_numbers<[1], [0], [0], [1], [0, 0, 1, 1], [], []>} : vector<8x64xf32>, vector<64x256xf32>, vector<8x256xf32> -> vector<8x256xf32>
    %337 = arith.addf %335, %336 : vector<8x256xf32>
    %338 = arith.negf %337 : vector<8x256xf32>
    %339 = math.exp %338 : vector<8x256xf32>
    %cst_69 = arith.constant 1.000000e+00 : f32
    %340 = vector.broadcast %cst_69 : f32 to vector<8x256xf32>
    %341 = arith.addf %340, %339 : vector<8x256xf32>
    %342 = arith.divf %340, %341 : vector<8x256xf32>
    %343 = vector.extract_strided_slice %342 {offsets = [0, 0], sizes = [8, 64], strides = [1, 1]} : vector<8x256xf32> to vector<8x64xf32>
    %344 = vector.extract_strided_slice %342 {offsets = [0, 64], sizes = [8, 64], strides = [1, 1]} : vector<8x256xf32> to vector<8x64xf32>
    %345 = vector.extract_strided_slice %342 {offsets = [0, 128], sizes = [8, 64], strides = [1, 1]} : vector<8x256xf32> to vector<8x64xf32>
    %cst_70 = arith.constant 2.000000e+00 : f32
    %346 = vector.broadcast %cst_70 : f32 to vector<8x64xf32>
    %347 = arith.mulf %345, %346 : vector<8x64xf32>
    %cst_71 = arith.constant 1.000000e+00 : f32
    %348 = vector.broadcast %cst_71 : f32 to vector<8x64xf32>
    %349 = arith.subf %347, %348 : vector<8x64xf32>
    %350 = vector.extract_strided_slice %342 {offsets = [0, 192], sizes = [8, 64], strides = [1, 1]} : vector<8x256xf32> to vector<8x64xf32>
    %351 = arith.mulf %344, %331 : vector<8x64xf32>
    %352 = arith.mulf %343, %349 : vector<8x64xf32>
    %353 = arith.addf %351, %352 : vector<8x64xf32>
    %354 = math.tanh %353 : vector<8x64xf32>
    %355 = arith.mulf %350, %354 : vector<8x64xf32>
    %356 = arith.addf %334, %355 : vector<8x64xf32>
    %357 = vector.extract_strided_slice %356 {offsets = [0, 0], sizes = [8, 32], strides = [1, 1]} : vector<8x64xf32> to vector<8x32xf32>
    %358 = vector.extract_strided_slice %356 {offsets = [0, 32], sizes = [8, 32], strides = [1, 1]} : vector<8x64xf32> to vector<8x32xf32>
    %359 = arith.addf %357, %358 : vector<8x32xf32>
    %cst_72 = arith.constant 6.250000e-02 : f32
    %360 = vector.broadcast %cst_72 : f32 to vector<8x32xf32>
    %361 = arith.mulf %359, %360 : vector<8x32xf32>
    %c0_73 = arith.constant 0 : index
    %c0_74 = arith.constant 0 : index
    %362 = vector.load %arg2[%c0_73, %c0_74] : memref<8x32xf32, #tpu.memory_space<vmem>>, vector<8x32xf32>
    tpu.vector_store %arg2[%c0_73, %c0_74], %361 {strides = array<i32>} : memref<8x32xf32, #tpu.memory_space<vmem>>, vector<8x32xf32>,
    return
  }
}

</mosaic_0001>

<llo_original>
// kernel: shared_lstm_encoder.1
$region0: #{shared_lstm_encoder.1}
  #allocation0 [shape = 'u32[]', space=smem, size = 0x4, offset = 0x4, fixed_abs, tag = 'smem constant byte address 0x4 - core index']
  #allocation1 [shape = 'u32[72,128]{1,0:T(1,128)}', space=vmem, size = 0x9000, scoped, tag = 'internal scratch']
  %s0 = inlined_call_operand.vmem [shape: f32[64,32], index: 0, kind: input, shape index: {}]
  %s1 = inlined_call_operand.vmem [shape: f32[304,256], index: 1, kind: input, shape index: {}]
  %s2 = inlined_call_operand.hbm [shape: f32[8,32], index: 2, kind: output, shape index: {}]
  %s3 = sld [smem:[#allocation0]]
  $region18: #{shared_lstm_encoder.1} parent=0
    _
  %s5 = ssub.s32 1, %s3
  %s6 = scalar_select 0, %s5, %s3
  $region1: #{shared_lstm_encoder.1} parent=0
    #allocation2 [shape = 'u8[4096]{0}', space=vmem, size = 0x1000, scoped, tag = 'output window, operand 0, single buffered']
    #allocation3 [shape = 's32[1]{0}', space=sflag, size = 0x4, scoped, tag = 'scoped memory for shared_lstm_encoder.1']
    %7 = vsyncpa [#allocation3], 0
    // Predicated region
    $region2: #{shared_lstm_encoder.1} parent=1 // pred_check
      _
    $region3: #{shared_lstm_encoder.1} parent=1 // pred_check_branch
      %9 = sbr.rel (0) target = $region5
    $region4: #{shared_lstm_encoder.1} parent=1 // pred_region
      _
    $region5: #{shared_lstm_encoder.1} parent=1 // pred_fallthru
      _
    // Predicated region
    $region6: #{shared_lstm_encoder.1} parent=1 // pred_check
      _
    $region7: #{shared_lstm_encoder.1} parent=1 // pred_check_branch
      %11 = sbr.rel (0) target = $region9
    $region8: #{shared_lstm_encoder.1} parent=1 // pred_region
      _
    $region9: #{shared_lstm_encoder.1} parent=1 // pred_fallthru
      _
    %v12 = vld [vmem:[%s0] sm:$0xff]
    %v13 = vld [vmem:[%s0 + $0x8] sm:$0xff]
    %v14 = vld [vmem:[%s0 + $0x10] sm:$0xff]
    %v15 = vld [vmem:[%s0 + $0x18] sm:$0xff]
    %v16 = vld [vmem:[%s0 + $0x20] sm:$0xff]
    %v17 = vld [vmem:[%s0 + $0x28] sm:$0xff]
    %v18 = vld [vmem:[%s0 + $0x30] sm:$0xff]
    %v19 = vld [vmem:[%s0 + $0x38] sm:$0xff]
    %v20 = vld [vmem:[%s1] sm:$0xff]
    %v21 = vld [vmem:[%s1 + $0x8] sm:$0xff]
    %v22 = vld [vmem:[%s1 + $0x10] sm:$0xff]
    %v23 = vld [vmem:[%s1 + $0x18] sm:$0xff]
    %v24 = vld [vmem:[%s1 + $0x20] sm:$0xff]
    %v25 = vld [vmem:[%s1 + $0x28] sm:$0xff]
    %v26 = vld [vmem:[%s1 + $0x30] sm:$0xff]
    %v27 = vld [vmem:[%s1 + $0x38] sm:$0xff]
    %v28 = vld [vmem:[%s1 + $0x40] sm:$0xff]
    %v29 = vld [vmem:[%s1 + $0x48] sm:$0xff]
    %v30 = vld [vmem:[%s1 + $0x50] sm:$0xff]
    %v31 = vld [vmem:[%s1 + $0x58] sm:$0xff]
    %v32 = vld [vmem:[%s1 + $0x60] sm:$0xff]
    %v33 = vld [vmem:[%s1 + $0x68] sm:$0xff]
    %v34 = vld [vmem:[%s1 + $0x70] sm:$0xff]
    %v35 = vld [vmem:[%s1 + $0x78] sm:$0xff]
    %v36 = vld [vmem:[%s1 + $0x80] sm:$0xff]
    %v37 = vld [vmem:[%s1 + $0x88] sm:$0xff]
    %v38 = vld [vmem:[%s1 + $0x90] sm:$0xff]
    %v39 = vld [vmem:[%s1 + $0x98] sm:$0xff]
    %v40 = vld [vmem:[%s1 + $0xa0] sm:$0xff]
    %v41 = vld [vmem:[%s1 + $0xa8] sm:$0xff]
    %v42 = vld [vmem:[%s1 + $0xb0] sm:$0xff]
    %v43 = vld [vmem:[%s1 + $0xb8] sm:$0xff]
    %s44 = scalar_lea.vmem %s1, 576
    %v45 = vld [vmem:[%s44] ss:$8 sm:$0x3]
    %v47 = vperm.slane %v45, 0
    %v48 = vperm.slane %v45, 1
    %vm51 = vcmask 261120
    %v53 = vsel %vm51, %v12, 0
    %v56 = vsel %vm51, %v13, 0
    %v59 = vsel %vm51, %v14, 0
    %v62 = vsel %vm51, %v15, 0
    %v65 = vsel %vm51, %v16, 0
    %v68 = vsel %vm51, %v17, 0
    %v71 = vsel %vm51, %v18, 0
    %v74 = vsel %vm51, %v19, 0
    %76 = vmatpush.msra.mxu0 0.0
    %77 = vmatpush.msra.mxu0 0.0
    %78 = vmatpush.msra.mxu0 0.0
    %79 = vmatpush.msra.mxu0 0.0
    %80 = vmatpush.msra.mxu0 0.0
    %81 = vmatpush.msra.mxu0 0.0
    %82 = vmatpush.msra.mxu0 0.0
    %83 = vmatpush.msra.mxu0 0.0
    %84 = vmatpush.msra.mxu0 0.0
    %85 = vmatpush.msra.mxu0 0.0
    %86 = vmatpush.msra.mxu0 0.0
    %87 = vmatpush.msra.mxu0 0.0
    %88 = vmatpush.msra.mxu0 %v26
    %89 = vmatpush.msra.mxu0 %v24
    %90 = vmatpush.msra.mxu0 %v22
    %91 = vmatpush.msra.mxu0 %v20
    %92 = vmatmul.f32.gmra.mxu0 %v53
    %v93 = vpop.f32.mrf.mxu0
    %v94 = vadd.f32 %v47, %v93
    %95 = vmatmul.f32.gmra.mxu0 %v56
    %v96 = vpop.f32.mrf.mxu0
    %v97 = vadd.f32 %v47, %v96
    %98 = vmatmul.f32.gmra.mxu0 %v59
    %v99 = vpop.f32.mrf.mxu0
    %v100 = vadd.f32 %v47, %v99
    %101 = vmatmul.f32.gmra.mxu0 %v62
    %v102 = vpop.f32.mrf.mxu0
    %v103 = vadd.f32 %v47, %v102
    %104 = vmatmul.f32.gmra.mxu0 %v65
    %v105 = vpop.f32.mrf.mxu0
    %v106 = vadd.f32 %v47, %v105
    %107 = vmatmul.f32.gmra.mxu0 %v68
    %v108 = vpop.f32.mrf.mxu0
    %v109 = vadd.f32 %v47, %v108
    %110 = vmatmul.f32.gmra.mxu0 %v71
    %v111 = vpop.f32.mrf.mxu0
    %v112 = vadd.f32 %v47, %v111
    %113 = vmatmul.f32.gmra.mxu0 %v74
    %v114 = vpop.f32.mrf.mxu0
    %v115 = vadd.f32 %v47, %v114
    %116 = vdwg.mxu0
    %117 = vmatpush.msra.mxu0 0.0
    %118 = vmatpush.msra.mxu0 0.0
    %119 = vmatpush.msra.mxu0 0.0
    %120 = vmatpush.msra.mxu0 0.0
    %121 = vmatpush.msra.mxu0 0.0
    %122 = vmatpush.msra.mxu0 0.0
    %123 = vmatpush.msra.mxu0 0.0
    %124 = vmatpush.msra.mxu0 0.0
    %125 = vmatpush.msra.mxu0 0.0
    %126 = vmatpush.msra.mxu0 0.0
    %127 = vmatpush.msra.mxu0 0.0
    %128 = vmatpush.msra.mxu0 0.0
    %129 = vmatpush.msra.mxu0 %v27
    %130 = vmatpush.msra.mxu0 %v25
    %131 = vmatpush.msra.mxu0 %v23
    %132 = vmatpush.msra.mxu0 %v21
    %133 = vmatmul.f32.gmra.mxu0 %v53
    %v134 = vpop.f32.mrf.mxu0
    %v135 = vadd.f32 %v48, %v134
    %136 = vmatmul.f32.gmra.mxu0 %v56
    %v137 = vpop.f32.mrf.mxu0
    %v138 = vadd.f32 %v48, %v137
    %139 = vmatmul.f32.gmra.mxu0 %v59
    %v140 = vpop.f32.mrf.mxu0
    %v141 = vadd.f32 %v48, %v140
    %142 = vmatmul.f32.gmra.mxu0 %v62
    %v143 = vpop.f32.mrf.mxu0
    %v144 = vadd.f32 %v48, %v143
    %145 = vmatmul.f32.gmra.mxu0 %v65
    %v146 = vpop.f32.mrf.mxu0
    %v147 = vadd.f32 %v48, %v146
    %148 = vmatmul.f32.gmra.mxu0 %v68
    %v149 = vpop.f32.mrf.mxu0
    %v150 = vadd.f32 %v48, %v149
    %151 = vmatmul.f32.gmra.mxu0 %v71
    %v152 = vpop.f32.mrf.mxu0
    %v153 = vadd.f32 %v48, %v152
    %154 = vmatmul.f32.gmra.mxu0 %v74
    %v155 = vpop.f32.mrf.mxu0
    %v156 = vadd.f32 %v48, %v155
    %157 = vdwg.mxu0
    %v158 = vxor.u32 %v94, 2147483648
    %v159 = vxor.u32 %v135, 2147483648
    %v160 = vmul.f32 %v158, 1.442695
    %v161 = vpow.pop %v160
    %v162 = vmul.f32 %v159, 1.442695
    %v163 = vpow.pop %v162
    %v164 = vadd.f32 %v161, 1.0
    %v165 = vadd.f32 %v163, 1.0
    %v166 = vrcp.pop %v164
    %v167 = vmul.f32 %v164, %v166
    %v168 = vsub.f32 1.0, %v167
    %v169 = vmul.f32 %v166, %v168
    %v170 = vadd.f32 %v166, %v169
    %vm171 = vweird.f32 %v164
    %vm172 = vweird.f32 %v166
    %vm173 = vmor %vm171, %vm172
    %v174 = vsel %vm173, %v166, %v170
    %v175 = vand.u32 2147483647, %v164
    %vm176 = vcmp.eq.f32.partialorder %v175, 8.507059e+37
    %v177 = vand.u32 %v164, 2147483648
    %v178 = vor.u32 1.1754944e-38, %v177
    %v179 = vsel %vm176, %v178, %v174
    %v180 = vmul.f32 1.0, %v179
    %v181 = vrcp.pop %v165
    %v182 = vmul.f32 %v165, %v181
    %v183 = vsub.f32 1.0, %v182
    %v184 = vmul.f32 %v181, %v183
    %v185 = vadd.f32 %v181, %v184
    %vm186 = vweird.f32 %v165
    %vm187 = vweird.f32 %v181
    %vm188 = vmor %vm186, %vm187
    %v189 = vsel %vm188, %v181, %v185
    %v190 = vand.u32 2147483647, %v165
    %vm191 = vcmp.eq.f32.partialorder %v190, 8.507059e+37
    %v192 = vand.u32 %v165, 2147483648
    %v193 = vor.u32 1.1754944e-38, %v192
    %v194 = vsel %vm191, %v193, %v189
    %v195 = vmul.f32 1.0, %v194
    %v196 = vmul.f32 %v195, 2.0
    %v197 = vsub.f32 %v196, 1.0
    %v198 = vmul.f32 %v180, %v197
    %v199 = vtanh.pop %v198
    %201 = vrot.lane.b32.xlu0 %v199, 64
    %v202 = vpop.permute.xlu0 %201
    %v204 = vmul.f32 %v195, %v202
    %206 = vrot.lane.b32.xlu0 %v204, 64
    %v207 = vpop.permute.xlu0 %206
    %vm208 = vcmask 523264
    %v209 = vsel %vm208, %v207, 0
    %211 = vmatpush.msra.mxu0 0.0
    %212 = vmatpush.msra.mxu0 0.0
    %213 = vmatpush.msra.mxu0 0.0
    %214 = vmatpush.msra.mxu0 0.0
    %215 = vmatpush.msra.mxu0 0.0
    %216 = vmatpush.msra.mxu0 0.0
    %217 = vmatpush.msra.mxu0 0.0
    %218 = vmatpush.msra.mxu0 0.0
    %219 = vmatpush.msra.mxu0 %v42
    %220 = vmatpush.msra.mxu0 %v40
    %221 = vmatpush.msra.mxu0 %v38
    %222 = vmatpush.msra.mxu0 %v36
    %223 = vmatpush.msra.mxu0 %v34
    %224 = vmatpush.msra.mxu0 %v32
    %225 = vmatpush.msra.mxu0 %v30
    %226 = vmatpush.msra.mxu0 %v28
    %227 = vmatmul.f32.gmra.mxu0 %v209
    %v228 = vpop.f32.mrf.mxu0
    %v229 = vadd.f32 0.0, %v228
    %230 = vdwg.mxu0
    %231 = vmatpush.msra.mxu0 0.0
    %232 = vmatpush.msra.mxu0 0.0
    %233 = vmatpush.msra.mxu0 0.0
    %234 = vmatpush.msra.mxu0 0.0
    %235 = vmatpush.msra.mxu0 0.0
    %236 = vmatpush.msra.mxu0 0.0
    %237 = vmatpush.msra.mxu0 0.0
    %238 = vmatpush.msra.mxu0 0.0
    %239 = vmatpush.msra.mxu0 %v43
    %240 = vmatpush.msra.mxu0 %v41
    %241 = vmatpush.msra.mxu0 %v39
    %242 = vmatpush.msra.mxu0 %v37
    %243 = vmatpush.msra.mxu0 %v35
    %244 = vmatpush.msra.mxu0 %v33
    %245 = vmatpush.msra.mxu0 %v31
    %246 = vmatpush.msra.mxu0 %v29
    %247 = vmatmul.f32.gmra.mxu0 %v209
    %v248 = vpop.f32.mrf.mxu0
    %v249 = vadd.f32 0.0, %v248
    %250 = vdwg.mxu0
    %v251 = vadd.f32 %v97, %v229
    %v252 = vadd.f32 %v138, %v249
    %v253 = vxor.u32 %v251, 2147483648
    %v254 = vxor.u32 %v252, 2147483648
    %v255 = vmul.f32 %v253, 1.442695
    %v256 = vpow.pop %v255
    %v257 = vmul.f32 %v254, 1.442695
    %v258 = vpow.pop %v257
    %v259 = vadd.f32 %v256, 1.0
    %v260 = vadd.f32 %v258, 1.0
    %v261 = vrcp.pop %v259
    %v262 = vmul.f32 %v259, %v261
    %v263 = vsub.f32 1.0, %v262
    %v264 = vmul.f32 %v261, %v263
    %v265 = vadd.f32 %v261, %v264
    %vm266 = vweird.f32 %v259
    %vm267 = vweird.f32 %v261
    %vm268 = vmor %vm266, %vm267
    %v269 = vsel %vm268, %v261, %v265
    %v270 = vand.u32 2147483647, %v259
    %vm271 = vcmp.eq.f32.partialorder %v270, 8.507059e+37
    %v272 = vand.u32 %v259, 2147483648
    %v273 = vor.u32 1.1754944e-38, %v272
    %v274 = vsel %vm271, %v273, %v269
    %v275 = vmul.f32 1.0, %v274
    %v276 = vrcp.pop %v260
    %v277 = vmul.f32 %v260, %v276
    %v278 = vsub.f32 1.0, %v277
    %v279 = vmul.f32 %v276, %v278
    %v280 = vadd.f32 %v276, %v279
    %vm281 = vweird.f32 %v260
    %vm282 = vweird.f32 %v276
    %vm283 = vmor %vm281, %vm282
    %v284 = vsel %vm283, %v276, %v280
    %v285 = vand.u32 2147483647, %v260
    %vm286 = vcmp.eq.f32.partialorder %v285, 8.507059e+37
    %v287 = vand.u32 %v260, 2147483648
    %v288 = vor.u32 1.1754944e-38, %v287
    %v289 = vsel %vm286, %v288, %v284
    %v290 = vmul.f32 1.0, %v289
    %v291 = vmul.f32 %v290, 2.0
    %v292 = vsub.f32 %v291, 1.0
    %294 = vrot.lane.b32.xlu0 %v198, 64
    %v295 = vpop.permute.xlu0 %294
    %v297 = vmul.f32 %v275, %v295
    %v298 = vmul.f32 %v275, %v292
    %300 = vrot.lane.b32.xlu0 %v298, 64
    %v301 = vpop.permute.xlu0 %300
    %v303 = vadd.f32 %v297, %v301
    %v304 = vtanh.pop %v303
    %v305 = vmul.f32 %v290, %v304
    %307 = vrot.lane.b32.xlu0 %v305, 64
    %v308 = vpop.permute.xlu0 %307
    %v309 = vsel %vm208, %v308, 0
    %311 = vmatpush.msra.mxu0 0.0
    %312 = vmatpush.msra.mxu0 0.0
    %313 = vmatpush.msra.mxu0 0.0
    %314 = vmatpush.msra.mxu0 0.0
    %315 = vmatpush.msra.mxu0 0.0
    %316 = vmatpush.msra.mxu0 0.0
    %317 = vmatpush.msra.mxu0 0.0
    %318 = vmatpush.msra.mxu0 0.0
    %319 = vmatpush.msra.mxu0 %v42
    %320 = vmatpush.msra.mxu0 %v40
    %321 = vmatpush.msra.mxu0 %v38
    %322 = vmatpush.msra.mxu0 %v36
    %323 = vmatpush.msra.mxu0 %v34
    %324 = vmatpush.msra.mxu0 %v32
    %325 = vmatpush.msra.mxu0 %v30
    %326 = vmatpush.msra.mxu0 %v28
    %327 = vmatmul.f32.gmra.mxu0 %v309
    %v328 = vpop.f32.mrf.mxu0
    %v329 = vadd.f32 0.0, %v328
    %330 = vdwg.mxu0
    %331 = vmatpush.msra.mxu0 0.0
    %332 = vmatpush.msra.mxu0 0.0
    %333 = vmatpush.msra.mxu0 0.0
    %334 = vmatpush.msra.mxu0 0.0
    %335 = vmatpush.msra.mxu0 0.0
    %336 = vmatpush.msra.mxu0 0.0
    %337 = vmatpush.msra.mxu0 0.0
    %338 = vmatpush.msra.mxu0 0.0
    %339 = vmatpush.msra.mxu0 %v43
    %340 = vmatpush.msra.mxu0 %v41
    %341 = vmatpush.msra.mxu0 %v39
    %342 = vmatpush.msra.mxu0 %v37
    %343 = vmatpush.msra.mxu0 %v35
    %344 = vmatpush.msra.mxu0 %v33
    %345 = vmatpush.msra.mxu0 %v31
    %346 = vmatpush.msra.mxu0 %v29
    %347 = vmatmul.f32.gmra.mxu0 %v309
    %v348 = vpop.f32.mrf.mxu0
    %v349 = vadd.f32 0.0, %v348
    %350 = vdwg.mxu0
    %v351 = vadd.f32 %v100, %v329
    %v352 = vadd.f32 %v141, %v349
    %v353 = vxor.u32 %v351, 2147483648
    %v354 = vxor.u32 %v352, 2147483648
    %v355 = vmul.f32 %v353, 1.442695
    %v356 = vpow.pop %v355
    %v357 = vmul.f32 %v354, 1.442695
    %v358 = vpow.pop %v357
    %v359 = vadd.f32 %v356, 1.0
    %v360 = vadd.f32 %v358, 1.0
    %v361 = vrcp.pop %v359
    %v362 = vmul.f32 %v359, %v361
    %v363 = vsub.f32 1.0, %v362
    %v364 = vmul.f32 %v361, %v363
    %v365 = vadd.f32 %v361, %v364
    %vm366 = vweird.f32 %v359
    %vm367 = vweird.f32 %v361
    %vm368 = vmor %vm366, %vm367
    %v369 = vsel %vm368, %v361, %v365
    %v370 = vand.u32 2147483647, %v359
    %vm371 = vcmp.eq.f32.partialorder %v370, 8.507059e+37
    %v372 = vand.u32 %v359, 2147483648
    %v373 = vor.u32 1.1754944e-38, %v372
    %v374 = vsel %vm371, %v373, %v369
    %v375 = vmul.f32 1.0, %v374
    %v376 = vrcp.pop %v360
    %v377 = vmul.f32 %v360, %v376
    %v378 = vsub.f32 1.0, %v377
    %v379 = vmul.f32 %v376, %v378
    %v380 = vadd.f32 %v376, %v379
    %vm381 = vweird.f32 %v360
    %vm382 = vweird.f32 %v376
    %vm383 = vmor %vm381, %vm382
    %v384 = vsel %vm383, %v376, %v380
    %v385 = vand.u32 2147483647, %v360
    %vm386 = vcmp.eq.f32.partialorder %v385, 8.507059e+37
    %v387 = vand.u32 %v360, 2147483648
    %v388 = vor.u32 1.1754944e-38, %v387
    %v389 = vsel %vm386, %v388, %v384
    %v390 = vmul.f32 1.0, %v389
    %v391 = vmul.f32 %v390, 2.0
    %v392 = vsub.f32 %v391, 1.0
    %v393 = vmul.f32 %v375, %v303
    %v394 = vmul.f32 %v375, %v392
    %396 = vrot.lane.b32.xlu0 %v394, 64
    %v397 = vpop.permute.xlu0 %396
    %v399 = vadd.f32 %v393, %v397
    %v400 = vtanh.pop %v399
    %v401 = vmul.f32 %v390, %v400
    %403 = vrot.lane.b32.xlu0 %v401, 64
    %v404 = vpop.permute.xlu0 %403
    %v405 = vsel %vm208, %v404, 0
    %407 = vmatpush.msra.mxu0 0.0
    %408 = vmatpush.msra.mxu0 0.0
    %409 = vmatpush.msra.mxu0 0.0
    %410 = vmatpush.msra.mxu0 0.0
    %411 = vmatpush.msra.mxu0 0.0
    %412 = vmatpush.msra.mxu0 0.0
    %413 = vmatpush.msra.mxu0 0.0
    %414 = vmatpush.msra.mxu0 0.0
    %415 = vmatpush.msra.mxu0 %v42
    %416 = vmatpush.msra.mxu0 %v40
    %417 = vmatpush.msra.mxu0 %v38
    %418 = vmatpush.msra.mxu0 %v36
    %419 = vmatpush.msra.mxu0 %v34
    %420 = vmatpush.msra.mxu0 %v32
    %421 = vmatpush.msra.mxu0 %v30
    %422 = vmatpush.msra.mxu0 %v28
    %423 = vmatmul.f32.gmra.mxu0 %v405
    %v424 = vpop.f32.mrf.mxu0
    %v425 = vadd.f32 0.0, %v424
    %426 = vdwg.mxu0
    %427 = vmatpush.msra.mxu0 0.0
    %428 = vmatpush.msra.mxu0 0.0
    %429 = vmatpush.msra.mxu0 0.0
    %430 = vmatpush.msra.mxu0 0.0
    %431 = vmatpush.msra.mxu0 0.0
    %432 = vmatpush.msra.mxu0 0.0
    %433 = vmatpush.msra.mxu0 0.0
    %434 = vmatpush.msra.mxu0 0.0
    %435 = vmatpush.msra.mxu0 %v43
    %436 = vmatpush.msra.mxu0 %v41
    %437 = vmatpush.msra.mxu0 %v39
    %438 = vmatpush.msra.mxu0 %v37
    %439 = vmatpush.msra.mxu0 %v35
    %440 = vmatpush.msra.mxu0 %v33
    %441 = vmatpush.msra.mxu0 %v31
    %442 = vmatpush.msra.mxu0 %v29
    %443 = vmatmul.f32.gmra.mxu0 %v405
    %v444 = vpop.f32.mrf.mxu0
    %v445 = vadd.f32 0.0, %v444
    %446 = vdwg.mxu0
    %v447 = vadd.f32 %v103, %v425
    %v448 = vadd.f32 %v144, %v445
    %v449 = vxor.u32 %v447, 2147483648
    %v450 = vxor.u32 %v448, 2147483648
    %v451 = vmul.f32 %v449, 1.442695
    %v452 = vpow.pop %v451
    %v453 = vmul.f32 %v450, 1.442695
    %v454 = vpow.pop %v453
    %v455 = vadd.f32 %v452, 1.0
    %v456 = vadd.f32 %v454, 1.0
    %v457 = vrcp.pop %v455
    %v458 = vmul.f32 %v455, %v457
    %v459 = vsub.f32 1.0, %v458
    %v460 = vmul.f32 %v457, %v459
    %v461 = vadd.f32 %v457, %v460
    %vm462 = vweird.f32 %v455
    %vm463 = vweird.f32 %v457
    %vm464 = vmor %vm462, %vm463
    %v465 = vsel %vm464, %v457, %v461
    %v466 = vand.u32 2147483647, %v455
    %vm467 = vcmp.eq.f32.partialorder %v466, 8.507059e+37
    %v468 = vand.u32 %v455, 2147483648
    %v469 = vor.u32 1.1754944e-38, %v468
    %v470 = vsel %vm467, %v469, %v465
    %v471 = vmul.f32 1.0, %v470
    %v472 = vrcp.pop %v456
    %v473 = vmul.f32 %v456, %v472
    %v474 = vsub.f32 1.0, %v473
    %v475 = vmul.f32 %v472, %v474
    %v476 = vadd.f32 %v472, %v475
    %vm477 = vweird.f32 %v456
    %vm478 = vweird.f32 %v472
    %vm479 = vmor %vm477, %vm478
    %v480 = vsel %vm479, %v472, %v476
    %v481 = vand.u32 2147483647, %v456
    %vm482 = vcmp.eq.f32.partialorder %v481, 8.507059e+37
    %v483 = vand.u32 %v456, 2147483648
    %v484 = vor.u32 1.1754944e-38, %v483
    %v485 = vsel %vm482, %v484, %v480
    %v486 = vmul.f32 1.0, %v485
    %v487 = vmul.f32 %v486, 2.0
    %v488 = vsub.f32 %v487, 1.0
    %v489 = vmul.f32 %v471, %v399
    %v490 = vmul.f32 %v471, %v488
    %492 = vrot.lane.b32.xlu0 %v490, 64
    %v493 = vpop.permute.xlu0 %492
    %v495 = vadd.f32 %v489, %v493
    %v496 = vtanh.pop %v495
    %v497 = vmul.f32 %v486, %v496
    %499 = vrot.lane.b32.xlu0 %v497, 64
    %v500 = vpop.permute.xlu0 %499
    %v501 = vsel %vm208, %v500, 0
    %503 = vmatpush.msra.mxu0 0.0
    %504 = vmatpush.msra.mxu0 0.0
    %505 = vmatpush.msra.mxu0 0.0
    %506 = vmatpush.msra.mxu0 0.0
    %507 = vmatpush.msra.mxu0 0.0
    %508 = vmatpush.msra.mxu0 0.0
    %509 = vmatpush.msra.mxu0 0.0
    %510 = vmatpush.msra.mxu0 0.0
    %511 = vmatpush.msra.mxu0 %v42
    %512 = vmatpush.msra.mxu0 %v40
    %513 = vmatpush.msra.mxu0 %v38
    %514 = vmatpush.msra.mxu0 %v36
    %515 = vmatpush.msra.mxu0 %v34
    %516 = vmatpush.msra.mxu0 %v32
    %517 = vmatpush.msra.mxu0 %v30
    %518 = vmatpush.msra.mxu0 %v28
    %519 = vmatmul.f32.gmra.mxu0 %v501
    %v520 = vpop.f32.mrf.mxu0
    %v521 = vadd.f32 0.0, %v520
    %522 = vdwg.mxu0
    %523 = vmatpush.msra.mxu0 0.0
    %524 = vmatpush.msra.mxu0 0.0
    %525 = vmatpush.msra.mxu0 0.0
    %526 = vmatpush.msra.mxu0 0.0
    %527 = vmatpush.msra.mxu0 0.0
    %528 = vmatpush.msra.mxu0 0.0
    %529 = vmatpush.msra.mxu0 0.0
    %530 = vmatpush.msra.mxu0 0.0
    %531 = vmatpush.msra.mxu0 %v43
    %532 = vmatpush.msra.mxu0 %v41
    %533 = vmatpush.msra.mxu0 %v39
    %534 = vmatpush.msra.mxu0 %v37
    %535 = vmatpush.msra.mxu0 %v35
    %536 = vmatpush.msra.mxu0 %v33
    %537 = vmatpush.msra.mxu0 %v31
    %538 = vmatpush.msra.mxu0 %v29
    %539 = vmatmul.f32.gmra.mxu0 %v501
    %v540 = vpop.f32.mrf.mxu0
    %v541 = vadd.f32 0.0, %v540
    %542 = vdwg.mxu0
    %v543 = vadd.f32 %v106, %v521
    %v544 = vadd.f32 %v147, %v541
    %v545 = vxor.u32 %v543, 2147483648
    %v546 = vxor.u32 %v544, 2147483648
    %v547 = vmul.f32 %v545, 1.442695
    %v548 = vpow.pop %v547
    %v549 = vmul.f32 %v546, 1.442695
    %v550 = vpow.pop %v549
    %v551 = vadd.f32 %v548, 1.0
    %v552 = vadd.f32 %v550, 1.0
    %v553 = vrcp.pop %v551
    %v554 = vmul.f32 %v551, %v553
    %v555 = vsub.f32 1.0, %v554
    %v556 = vmul.f32 %v553, %v555
    %v557 = vadd.f32 %v553, %v556
    %vm558 = vweird.f32 %v551
    %vm559 = vweird.f32 %v553
    %vm560 = vmor %vm558, %vm559
    %v561 = vsel %vm560, %v553, %v557
    %v562 = vand.u32 2147483647, %v551
    %vm563 = vcmp.eq.f32.partialorder %v562, 8.507059e+37
    %v564 = vand.u32 %v551, 2147483648
    %v565 = vor.u32 1.1754944e-38, %v564
    %v566 = vsel %vm563, %v565, %v561
    %v567 = vmul.f32 1.0, %v566
    %v568 = vrcp.pop %v552
    %v569 = vmul.f32 %v552, %v568
    %v570 = vsub.f32 1.0, %v569
    %v571 = vmul.f32 %v568, %v570
    %v572 = vadd.f32 %v568, %v571
    %vm573 = vweird.f32 %v552
    %vm574 = vweird.f32 %v568
    %vm575 = vmor %vm573, %vm574
    %v576 = vsel %vm575, %v568, %v572
    %v577 = vand.u32 2147483647, %v552
    %vm578 = vcmp.eq.f32.partialorder %v577, 8.507059e+37
    %v579 = vand.u32 %v552, 2147483648
    %v580 = vor.u32 1.1754944e-38, %v579
    %v581 = vsel %vm578, %v580, %v576
    %v582 = vmul.f32 1.0, %v581
    %v583 = vmul.f32 %v582, 2.0
    %v584 = vsub.f32 %v583, 1.0
    %v585 = vmul.f32 %v567, %v495
    %v586 = vmul.f32 %v567, %v584
    %588 = vrot.lane.b32.xlu0 %v586, 64
    %v589 = vpop.permute.xlu0 %588
    %v591 = vadd.f32 %v585, %v589
    %v592 = vtanh.pop %v591
    %v593 = vmul.f32 %v582, %v592
    %595 = vrot.lane.b32.xlu0 %v593, 64
    %v596 = vpop.permute.xlu0 %595
    %v597 = vsel %vm208, %v596, 0
    %599 = vmatpush.msra.mxu0 0.0
    %600 = vmatpush.msra.mxu0 0.0
    %601 = vmatpush.msra.mxu0 0.0
    %602 = vmatpush.msra.mxu0 0.0
    %603 = vmatpush.msra.mxu0 0.0
    %604 = vmatpush.msra.mxu0 0.0
    %605 = vmatpush.msra.mxu0 0.0
    %606 = vmatpush.msra.mxu0 0.0
    %607 = vmatpush.msra.mxu0 %v42
    %608 = vmatpush.msra.mxu0 %v40
    %609 = vmatpush.msra.mxu0 %v38
    %610 = vmatpush.msra.mxu0 %v36
    %611 = vmatpush.msra.mxu0 %v34
    %612 = vmatpush.msra.mxu0 %v32
    %613 = vmatpush.msra.mxu0 %v30
    %614 = vmatpush.msra.mxu0 %v28
    %615 = vmatmul.f32.gmra.mxu0 %v597
    %v616 = vpop.f32.mrf.mxu0
    %v617 = vadd.f32 0.0, %v616
    %618 = vdwg.mxu0
    %619 = vmatpush.msra.mxu0 0.0
    %620 = vmatpush.msra.mxu0 0.0
    %621 = vmatpush.msra.mxu0 0.0
    %622 = vmatpush.msra.mxu0 0.0
    %623 = vmatpush.msra.mxu0 0.0
    %624 = vmatpush.msra.mxu0 0.0
    %625 = vmatpush.msra.mxu0 0.0
    %626 = vmatpush.msra.mxu0 0.0
    %627 = vmatpush.msra.mxu0 %v43
    %628 = vmatpush.msra.mxu0 %v41
    %629 = vmatpush.msra.mxu0 %v39
    %630 = vmatpush.msra.mxu0 %v37
    %631 = vmatpush.msra.mxu0 %v35
    %632 = vmatpush.msra.mxu0 %v33
    %633 = vmatpush.msra.mxu0 %v31
    %634 = vmatpush.msra.mxu0 %v29
    %635 = vmatmul.f32.gmra.mxu0 %v597
    %v636 = vpop.f32.mrf.mxu0
    %v637 = vadd.f32 0.0, %v636
    %638 = vdwg.mxu0
    %v639 = vadd.f32 %v109, %v617
    %v640 = vadd.f32 %v150, %v637
    %v641 = vxor.u32 %v639, 2147483648
    %v642 = vxor.u32 %v640, 2147483648
    %v643 = vmul.f32 %v641, 1.442695
    %v644 = vpow.pop %v643
    %v645 = vmul.f32 %v642, 1.442695
    %v646 = vpow.pop %v645
    %v647 = vadd.f32 %v644, 1.0
    %v648 = vadd.f32 %v646, 1.0
    %v649 = vrcp.pop %v647
    %v650 = vmul.f32 %v647, %v649
    %v651 = vsub.f32 1.0, %v650
    %v652 = vmul.f32 %v649, %v651
    %v653 = vadd.f32 %v649, %v652
    %vm654 = vweird.f32 %v647
    %vm655 = vweird.f32 %v649
    %vm656 = vmor %vm654, %vm655
    %v657 = vsel %vm656, %v649, %v653
    %v658 = vand.u32 2147483647, %v647
    %vm659 = vcmp.eq.f32.partialorder %v658, 8.507059e+37
    %v660 = vand.u32 %v647, 2147483648
    %v661 = vor.u32 1.1754944e-38, %v660
    %v662 = vsel %vm659, %v661, %v657
    %v663 = vmul.f32 1.0, %v662
    %v664 = vrcp.pop %v648
    %v665 = vmul.f32 %v648, %v664
    %v666 = vsub.f32 1.0, %v665
    %v667 = vmul.f32 %v664, %v666
    %v668 = vadd.f32 %v664, %v667
    %vm669 = vweird.f32 %v648
    %vm670 = vweird.f32 %v664
    %vm671 = vmor %vm669, %vm670
    %v672 = vsel %vm671, %v664, %v668
    %v673 = vand.u32 2147483647, %v648
    %vm674 = vcmp.eq.f32.partialorder %v673, 8.507059e+37
    %v675 = vand.u32 %v648, 2147483648
    %v676 = vor.u32 1.1754944e-38, %v675
    %v677 = vsel %vm674, %v676, %v672
    %v678 = vmul.f32 1.0, %v677
    %v679 = vmul.f32 %v678, 2.0
    %v680 = vsub.f32 %v679, 1.0
    %v681 = vmul.f32 %v663, %v591
    %v682 = vmul.f32 %v663, %v680
    %684 = vrot.lane.b32.xlu0 %v682, 64
    %v685 = vpop.permute.xlu0 %684
    %v687 = vadd.f32 %v681, %v685
    %v688 = vtanh.pop %v687
    %v689 = vmul.f32 %v678, %v688
    %691 = vrot.lane.b32.xlu0 %v689, 64
    %v692 = vpop.permute.xlu0 %691
    %v693 = vsel %vm208, %v692, 0
    %695 = vmatpush.msra.mxu0 0.0
    %696 = vmatpush.msra.mxu0 0.0
    %697 = vmatpush.msra.mxu0 0.0
    %698 = vmatpush.msra.mxu0 0.0
    %699 = vmatpush.msra.mxu0 0.0
    %700 = vmatpush.msra.mxu0 0.0
    %701 = vmatpush.msra.mxu0 0.0
    %702 = vmatpush.msra.mxu0 0.0
    %703 = vmatpush.msra.mxu0 %v42
    %704 = vmatpush.msra.mxu0 %v40
    %705 = vmatpush.msra.mxu0 %v38
    %706 = vmatpush.msra.mxu0 %v36
    %707 = vmatpush.msra.mxu0 %v34
    %708 = vmatpush.msra.mxu0 %v32
    %709 = vmatpush.msra.mxu0 %v30
    %710 = vmatpush.msra.mxu0 %v28
    %711 = vmatmul.f32.gmra.mxu0 %v693
    %v712 = vpop.f32.mrf.mxu0
    %v713 = vadd.f32 0.0, %v712
    %714 = vdwg.mxu0
    %715 = vmatpush.msra.mxu0 0.0
    %716 = vmatpush.msra.mxu0 0.0
    %717 = vmatpush.msra.mxu0 0.0
    %718 = vmatpush.msra.mxu0 0.0
    %719 = vmatpush.msra.mxu0 0.0
    %720 = vmatpush.msra.mxu0 0.0
    %721 = vmatpush.msra.mxu0 0.0
    %722 = vmatpush.msra.mxu0 0.0
    %723 = vmatpush.msra.mxu0 %v43
    %724 = vmatpush.msra.mxu0 %v41
    %725 = vmatpush.msra.mxu0 %v39
    %726 = vmatpush.msra.mxu0 %v37
    %727 = vmatpush.msra.mxu0 %v35
    %728 = vmatpush.msra.mxu0 %v33
    %729 = vmatpush.msra.mxu0 %v31
    %730 = vmatpush.msra.mxu0 %v29
    %731 = vmatmul.f32.gmra.mxu0 %v693
    %v732 = vpop.f32.mrf.mxu0
    %v733 = vadd.f32 0.0, %v732
    %734 = vdwg.mxu0
    %v735 = vadd.f32 %v112, %v713
    %v736 = vadd.f32 %v153, %v733
    %v737 = vxor.u32 %v735, 2147483648
    %v738 = vxor.u32 %v736, 2147483648
    %v739 = vmul.f32 %v737, 1.442695
    %v740 = vpow.pop %v739
    %v741 = vmul.f32 %v738, 1.442695
    %v742 = vpow.pop %v741
    %v743 = vadd.f32 %v740, 1.0
    %v744 = vadd.f32 %v742, 1.0
    %v745 = vrcp.pop %v743
    %v746 = vmul.f32 %v743, %v745
    %v747 = vsub.f32 1.0, %v746
    %v748 = vmul.f32 %v745, %v747
    %v749 = vadd.f32 %v745, %v748
    %vm750 = vweird.f32 %v743
    %vm751 = vweird.f32 %v745
    %vm752 = vmor %vm750, %vm751
    %v753 = vsel %vm752, %v745, %v749
    %v754 = vand.u32 2147483647, %v743
    %vm755 = vcmp.eq.f32.partialorder %v754, 8.507059e+37
    %v756 = vand.u32 %v743, 2147483648
    %v757 = vor.u32 1.1754944e-38, %v756
    %v758 = vsel %vm755, %v757, %v753
    %v759 = vmul.f32 1.0, %v758
    %v760 = vrcp.pop %v744
    %v761 = vmul.f32 %v744, %v760
    %v762 = vsub.f32 1.0, %v761
    %v763 = vmul.f32 %v760, %v762
    %v764 = vadd.f32 %v760, %v763
    %vm765 = vweird.f32 %v744
    %vm766 = vweird.f32 %v760
    %vm767 = vmor %vm765, %vm766
    %v768 = vsel %vm767, %v760, %v764
    %v769 = vand.u32 2147483647, %v744
    %vm770 = vcmp.eq.f32.partialorder %v769, 8.507059e+37
    %v771 = vand.u32 %v744, 2147483648
    %v772 = vor.u32 1.1754944e-38, %v771
    %v773 = vsel %vm770, %v772, %v768
    %v774 = vmul.f32 1.0, %v773
    %v775 = vmul.f32 %v774, 2.0
    %v776 = vsub.f32 %v775, 1.0
    %v777 = vmul.f32 %v759, %v687
    %v778 = vmul.f32 %v759, %v776
    %780 = vrot.lane.b32.xlu0 %v778, 64
    %v781 = vpop.permute.xlu0 %780
    %v783 = vadd.f32 %v777, %v781
    %v784 = vtanh.pop %v783
    %v785 = vmul.f32 %v774, %v784
    %787 = vrot.lane.b32.xlu0 %v785, 64
    %v788 = vpop.permute.xlu0 %787
    %v789 = vsel %vm208, %v788, 0
    %791 = vmatpush.msra.mxu0 0.0
    %792 = vmatpush.msra.mxu0 0.0
    %793 = vmatpush.msra.mxu0 0.0
    %794 = vmatpush.msra.mxu0 0.0
    %795 = vmatpush.msra.mxu0 0.0
    %796 = vmatpush.msra.mxu0 0.0
    %797 = vmatpush.msra.mxu0 0.0
    %798 = vmatpush.msra.mxu0 0.0
    %799 = vmatpush.msra.mxu0 %v42
    %800 = vmatpush.msra.mxu0 %v40
    %801 = vmatpush.msra.mxu0 %v38
    %802 = vmatpush.msra.mxu0 %v36
    %803 = vmatpush.msra.mxu0 %v34
    %804 = vmatpush.msra.mxu0 %v32
    %805 = vmatpush.msra.mxu0 %v30
    %806 = vmatpush.msra.mxu0 %v28
    %807 = vmatmul.f32.gmra.mxu0 %v789
    %v808 = vpop.f32.mrf.mxu0
    %v809 = vadd.f32 0.0, %v808
    %810 = vdwg.mxu0
    %811 = vmatpush.msra.mxu0 0.0
    %812 = vmatpush.msra.mxu0 0.0
    %813 = vmatpush.msra.mxu0 0.0
    %814 = vmatpush.msra.mxu0 0.0
    %815 = vmatpush.msra.mxu0 0.0
    %816 = vmatpush.msra.mxu0 0.0
    %817 = vmatpush.msra.mxu0 0.0
    %818 = vmatpush.msra.mxu0 0.0
    %819 = vmatpush.msra.mxu0 %v43
    %820 = vmatpush.msra.mxu0 %v41
    %821 = vmatpush.msra.mxu0 %v39
    %822 = vmatpush.msra.mxu0 %v37
    %823 = vmatpush.msra.mxu0 %v35
    %824 = vmatpush.msra.mxu0 %v33
    %825 = vmatpush.msra.mxu0 %v31
    %826 = vmatpush.msra.mxu0 %v29
    %827 = vmatmul.f32.gmra.mxu0 %v789
    %v828 = vpop.f32.mrf.mxu0
    %v829 = vadd.f32 0.0, %v828
    %830 = vdwg.mxu0
    %v831 = vadd.f32 %v115, %v809
    %v832 = vadd.f32 %v156, %v829
    %v833 = vxor.u32 %v831, 2147483648
    %v834 = vxor.u32 %v832, 2147483648
    %v835 = vmul.f32 %v833, 1.442695
    %v836 = vpow.pop %v835
    %v837 = vmul.f32 %v834, 1.442695
    %v838 = vpow.pop %v837
    %v839 = vadd.f32 %v836, 1.0
    %v840 = vadd.f32 %v838, 1.0
    %v841 = vrcp.pop %v839
    %v842 = vmul.f32 %v839, %v841
    %v843 = vsub.f32 1.0, %v842
    %v844 = vmul.f32 %v841, %v843
    %v845 = vadd.f32 %v841, %v844
    %vm846 = vweird.f32 %v839
    %vm847 = vweird.f32 %v841
    %vm848 = vmor %vm846, %vm847
    %v849 = vsel %vm848, %v841, %v845
    %v850 = vand.u32 2147483647, %v839
    %vm851 = vcmp.eq.f32.partialorder %v850, 8.507059e+37
    %v852 = vand.u32 %v839, 2147483648
    %v853 = vor.u32 1.1754944e-38, %v852
    %v854 = vsel %vm851, %v853, %v849
    %v855 = vmul.f32 1.0, %v854
    %v856 = vrcp.pop %v840
    %v857 = vmul.f32 %v840, %v856
    %v858 = vsub.f32 1.0, %v857
    %v859 = vmul.f32 %v856, %v858
    %v860 = vadd.f32 %v856, %v859
    %vm861 = vweird.f32 %v840
    %vm862 = vweird.f32 %v856
    %vm863 = vmor %vm861, %vm862
    %v864 = vsel %vm863, %v856, %v860
    %v865 = vand.u32 2147483647, %v840
    %vm866 = vcmp.eq.f32.partialorder %v865, 8.507059e+37
    %v867 = vand.u32 %v840, 2147483648
    %v868 = vor.u32 1.1754944e-38, %v867
    %v869 = vsel %vm866, %v868, %v864
    %v870 = vmul.f32 1.0, %v869
    %v871 = vmul.f32 %v870, 2.0
    %v872 = vsub.f32 %v871, 1.0
    %v873 = vmul.f32 %v855, %v783
    %v874 = vmul.f32 %v855, %v872
    %876 = vrot.lane.b32.xlu0 %v874, 64
    %v877 = vpop.permute.xlu0 %876
    %v879 = vadd.f32 %v873, %v877
    %v880 = vtanh.pop %v879
    %v881 = vmul.f32 %v870, %v880
    %v883 = vsel %vm208, %v207, %v881
    %v885 = vsel %vm208, %v308, %v785
    %v887 = vsel %vm208, %v404, %v689
    %v889 = vsel %vm208, %v500, %v593
    %v891 = vsel %vm208, %v596, %v497
    %v893 = vsel %vm208, %v692, %v401
    %v895 = vsel %vm208, %v788, %v305
    %897 = vrot.lane.b32.xlu0 %v881, 64
    %v898 = vpop.permute.xlu0 %897
    %v900 = vsel %vm208, %v898, %v204
    %v901 = vld [vmem:[%s1 + $0xc0] sm:$0xff]
    %v902 = vld [vmem:[%s1 + $0xc8] sm:$0xff]
    %v903 = vld [vmem:[%s1 + $0xd0] sm:$0xff]
    %v904 = vld [vmem:[%s1 + $0xd8] sm:$0xff]
    %v905 = vld [vmem:[%s1 + $0xe0] sm:$0xff]
    %v906 = vld [vmem:[%s1 + $0xe8] sm:$0xff]
    %v907 = vld [vmem:[%s1 + $0xf0] sm:$0xff]
    %v908 = vld [vmem:[%s1 + $0xf8] sm:$0xff]
    %v909 = vld [vmem:[%s1 + $0x100] sm:$0xff]
    %v910 = vld [vmem:[%s1 + $0x108] sm:$0xff]
    %v911 = vld [vmem:[%s1 + $0x110] sm:$0xff]
    %v912 = vld [vmem:[%s1 + $0x118] sm:$0xff]
    %v913 = vld [vmem:[%s1 + $0x120] sm:$0xff]
    %v914 = vld [vmem:[%s1 + $0x128] sm:$0xff]
    %v915 = vld [vmem:[%s1 + $0x130] sm:$0xff]
    %v916 = vld [vmem:[%s1 + $0x138] sm:$0xff]
    %v917 = vld [vmem:[%s1 + $0x140] sm:$0xff]
    %v918 = vld [vmem:[%s1 + $0x148] sm:$0xff]
    %v919 = vld [vmem:[%s1 + $0x150] sm:$0xff]
    %v920 = vld [vmem:[%s1 + $0x158] sm:$0xff]
    %v921 = vld [vmem:[%s1 + $0x160] sm:$0xff]
    %v922 = vld [vmem:[%s1 + $0x168] sm:$0xff]
    %v923 = vld [vmem:[%s1 + $0x170] sm:$0xff]
    %v924 = vld [vmem:[%s1 + $0x178] sm:$0xff]
    %v925 = vld [vmem:[%s1 + $0x180] sm:$0xff]
    %v926 = vld [vmem:[%s1 + $0x188] sm:$0xff]
    %v927 = vld [vmem:[%s1 + $0x190] sm:$0xff]
    %v928 = vld [vmem:[%s1 + $0x198] sm:$0xff]
    %v929 = vld [vmem:[%s1 + $0x1a0] sm:$0xff]
    %v930 = vld [vmem:[%s1 + $0x1a8] sm:$0xff]
    %v931 = vld [vmem:[%s1 + $0x1b0] sm:$0xff]
    %v932 = vld [vmem:[%s1 + $0x1b8] sm:$0xff]
    %s933 = scalar_lea.vmem %s1, 592
    %v934 = vld [vmem:[%s933] ss:$8 sm:$0x3]
    %v936 = vperm.slane %v934, 0
    %v937 = vperm.slane %v934, 1
    %940 = vmatpush.msra.mxu0 %v931
    %941 = vmatpush.msra.mxu0 %v929
    %942 = vmatpush.msra.mxu0 %v927
    %943 = vmatpush.msra.mxu0 %v925
    %944 = vmatpush.msra.mxu0 %v923
    %945 = vmatpush.msra.mxu0 %v921
    %946 = vmatpush.msra.mxu0 %v919
    %947 = vmatpush.msra.mxu0 %v917
    %948 = vmatpush.msra.mxu0 %v915
    %949 = vmatpush.msra.mxu0 %v913
    %950 = vmatpush.msra.mxu0 %v911
    %951 = vmatpush.msra.mxu0 %v909
    %952 = vmatpush.msra.mxu0 %v907
    %953 = vmatpush.msra.mxu0 %v905
    %954 = vmatpush.msra.mxu0 %v903
    %955 = vmatpush.msra.mxu0 %v901
    %956 = vmatmul.f32.gmra.mxu0 %v883
    %v957 = vpop.f32.mrf.mxu0
    %v958 = vadd.f32 %v936, %v957
    %959 = vmatmul.f32.gmra.mxu0 %v885
    %v960 = vpop.f32.mrf.mxu0
    %v961 = vadd.f32 %v936, %v960
    %962 = vmatmul.f32.gmra.mxu0 %v887
    %v963 = vpop.f32.mrf.mxu0
    %v964 = vadd.f32 %v936, %v963
    %965 = vmatmul.f32.gmra.mxu0 %v889
    %v966 = vpop.f32.mrf.mxu0
    %v967 = vadd.f32 %v936, %v966
    %968 = vmatmul.f32.gmra.mxu0 %v891
    %v969 = vpop.f32.mrf.mxu0
    %v970 = vadd.f32 %v936, %v969
    %971 = vmatmul.f32.gmra.mxu0 %v893
    %v972 = vpop.f32.mrf.mxu0
    %v973 = vadd.f32 %v936, %v972
    %974 = vmatmul.f32.gmra.mxu0 %v895
    %v975 = vpop.f32.mrf.mxu0
    %v976 = vadd.f32 %v936, %v975
    %977 = vmatmul.f32.gmra.mxu0 %v900
    %v978 = vpop.f32.mrf.mxu0
    %v979 = vadd.f32 %v936, %v978
    %980 = vdwg.mxu0
    %981 = vmatpush.msra.mxu0 %v932
    %982 = vmatpush.msra.mxu0 %v930
    %983 = vmatpush.msra.mxu0 %v928
    %984 = vmatpush.msra.mxu0 %v926
    %985 = vmatpush.msra.mxu0 %v924
    %986 = vmatpush.msra.mxu0 %v922
    %987 = vmatpush.msra.mxu0 %v920
    %988 = vmatpush.msra.mxu0 %v918
    %989 = vmatpush.msra.mxu0 %v916
    %990 = vmatpush.msra.mxu0 %v914
    %991 = vmatpush.msra.mxu0 %v912
    %992 = vmatpush.msra.mxu0 %v910
    %993 = vmatpush.msra.mxu0 %v908
    %994 = vmatpush.msra.mxu0 %v906
    %995 = vmatpush.msra.mxu0 %v904
    %996 = vmatpush.msra.mxu0 %v902
    %997 = vmatmul.f32.gmra.mxu0 %v883
    %v998 = vpop.f32.mrf.mxu0
    %v999 = vadd.f32 %v937, %v998
    %1000 = vmatmul.f32.gmra.mxu0 %v885
    %v1001 = vpop.f32.mrf.mxu0
    %v1002 = vadd.f32 %v937, %v1001
    %1003 = vmatmul.f32.gmra.mxu0 %v887
    %v1004 = vpop.f32.mrf.mxu0
    %v1005 = vadd.f32 %v937, %v1004
    %1006 = vmatmul.f32.gmra.mxu0 %v889
    %v1007 = vpop.f32.mrf.mxu0
    %v1008 = vadd.f32 %v937, %v1007
    %1009 = vmatmul.f32.gmra.mxu0 %v891
    %v1010 = vpop.f32.mrf.mxu0
    %v1011 = vadd.f32 %v937, %v1010
    %1012 = vmatmul.f32.gmra.mxu0 %v893
    %v1013 = vpop.f32.mrf.mxu0
    %v1014 = vadd.f32 %v937, %v1013
    %1015 = vmatmul.f32.gmra.mxu0 %v895
    %v1016 = vpop.f32.mrf.mxu0
    %v1017 = vadd.f32 %v937, %v1016
    %1018 = vmatmul.f32.gmra.mxu0 %v900
    %v1019 = vpop.f32.mrf.mxu0
    %v1020 = vadd.f32 %v937, %v1019
    %1021 = vdwg.mxu0
    %v1022 = vld [vmem:[%s1 + $0x1c0] sm:$0xff]
    %v1023 = vld [vmem:[%s1 + $0x1c8] sm:$0xff]
    %v1024 = vld [vmem:[%s1 + $0x1d0] sm:$0xff]
    %v1025 = vld [vmem:[%s1 + $0x1d8] sm:$0xff]
    %v1026 = vld [vmem:[%s1 + $0x1e0] sm:$0xff]
    %v1027 = vld [vmem:[%s1 + $0x1e8] sm:$0xff]
    %v1028 = vld [vmem:[%s1 + $0x1f0] sm:$0xff]
    %v1029 = vld [vmem:[%s1 + $0x1f8] sm:$0xff]
    %v1030 = vld [vmem:[%s1 + $0x200] sm:$0xff]
    %v1031 = vld [vmem:[%s1 + $0x208] sm:$0xff]
    %v1032 = vld [vmem:[%s1 + $0x210] sm:$0xff]
    %v1033 = vld [vmem:[%s1 + $0x218] sm:$0xff]
    %v1034 = vld [vmem:[%s1 + $0x220] sm:$0xff]
    %v1035 = vld [vmem:[%s1 + $0x228] sm:$0xff]
    %v1036 = vld [vmem:[%s1 + $0x230] sm:$0xff]
    %v1037 = vld [vmem:[%s1 + $0x238] sm:$0xff]
    %v1038 = vxor.u32 %v958, 2147483648
    %v1039 = vxor.u32 %v999, 2147483648
    %v1040 = vmul.f32 %v1038, 1.442695
    %v1041 = vpow.pop %v1040
    %v1042 = vmul.f32 %v1039, 1.442695
    %v1043 = vpow.pop %v1042
    %v1044 = vadd.f32 %v1041, 1.0
    %v1045 = vadd.f32 %v1043, 1.0
    %v1046 = vrcp.pop %v1044
    %v1047 = vmul.f32 %v1044, %v1046
    %v1048 = vsub.f32 1.0, %v1047
    %v1049 = vmul.f32 %v1046, %v1048
    %v1050 = vadd.f32 %v1046, %v1049
    %vm1051 = vweird.f32 %v1044
    %vm1052 = vweird.f32 %v1046
    %vm1053 = vmor %vm1051, %vm1052
    %v1054 = vsel %vm1053, %v1046, %v1050
    %v1055 = vand.u32 2147483647, %v1044
    %vm1056 = vcmp.eq.f32.partialorder %v1055, 8.507059e+37
    %v1057 = vand.u32 %v1044, 2147483648
    %v1058 = vor.u32 1.1754944e-38, %v1057
    %v1059 = vsel %vm1056, %v1058, %v1054
    %v1060 = vmul.f32 1.0, %v1059
    %v1061 = vrcp.pop %v1045
    %v1062 = vmul.f32 %v1045, %v1061
    %v1063 = vsub.f32 1.0, %v1062
    %v1064 = vmul.f32 %v1061, %v1063
    %v1065 = vadd.f32 %v1061, %v1064
    %vm1066 = vweird.f32 %v1045
    %vm1067 = vweird.f32 %v1061
    %vm1068 = vmor %vm1066, %vm1067
    %v1069 = vsel %vm1068, %v1061, %v1065
    %v1070 = vand.u32 2147483647, %v1045
    %vm1071 = vcmp.eq.f32.partialorder %v1070, 8.507059e+37
    %v1072 = vand.u32 %v1045, 2147483648
    %v1073 = vor.u32 1.1754944e-38, %v1072
    %v1074 = vsel %vm1071, %v1073, %v1069
    %v1075 = vmul.f32 1.0, %v1074
    %v1076 = vmul.f32 %v1075, 2.0
    %v1077 = vsub.f32 %v1076, 1.0
    %v1078 = vmul.f32 %v1060, %v1077
    %v1079 = vtanh.pop %v1078
    %1081 = vrot.lane.b32.xlu0 %v1079, 64
    %v1082 = vpop.permute.xlu0 %1081
    %v1084 = vmul.f32 %v1075, %v1082
    %v1085 = vadd.f32 %v1084, 0.0
    %1087 = vrot.lane.b32.xlu0 %v1084, 64
    %v1088 = vpop.permute.xlu0 %1087
    %v1089 = vsel %vm208, %v1088, 0
    %1091 = vmatpush.msra.mxu0 0.0
    %1092 = vmatpush.msra.mxu0 0.0
    %1093 = vmatpush.msra.mxu0 0.0
    %1094 = vmatpush.msra.mxu0 0.0
    %1095 = vmatpush.msra.mxu0 0.0
    %1096 = vmatpush.msra.mxu0 0.0
    %1097 = vmatpush.msra.mxu0 0.0
    %1098 = vmatpush.msra.mxu0 0.0
    %1099 = vmatpush.msra.mxu0 %v1036
    %1100 = vmatpush.msra.mxu0 %v1034
    %1101 = vmatpush.msra.mxu0 %v1032
    %1102 = vmatpush.msra.mxu0 %v1030
    %1103 = vmatpush.msra.mxu0 %v1028
    %1104 = vmatpush.msra.mxu0 %v1026
    %1105 = vmatpush.msra.mxu0 %v1024
    %1106 = vmatpush.msra.mxu0 %v1022
    %1107 = vmatmul.f32.gmra.mxu0 %v1089
    %v1108 = vpop.f32.mrf.mxu0
    %v1109 = vadd.f32 0.0, %v1108
    %1110 = vdwg.mxu0
    %1111 = vmatpush.msra.mxu0 0.0
    %1112 = vmatpush.msra.mxu0 0.0
    %1113 = vmatpush.msra.mxu0 0.0
    %1114 = vmatpush.msra.mxu0 0.0
    %1115 = vmatpush.msra.mxu0 0.0
    %1116 = vmatpush.msra.mxu0 0.0
    %1117 = vmatpush.msra.mxu0 0.0
    %1118 = vmatpush.msra.mxu0 0.0
    %1119 = vmatpush.msra.mxu0 %v1037
    %1120 = vmatpush.msra.mxu0 %v1035
    %1121 = vmatpush.msra.mxu0 %v1033
    %1122 = vmatpush.msra.mxu0 %v1031
    %1123 = vmatpush.msra.mxu0 %v1029
    %1124 = vmatpush.msra.mxu0 %v1027
    %1125 = vmatpush.msra.mxu0 %v1025
    %1126 = vmatpush.msra.mxu0 %v1023
    %1127 = vmatmul.f32.gmra.mxu0 %v1089
    %v1128 = vpop.f32.mrf.mxu0
    %v1129 = vadd.f32 0.0, %v1128
    %1130 = vdwg.mxu0
    %v1131 = vadd.f32 %v961, %v1109
    %v1132 = vadd.f32 %v1002, %v1129
    %v1133 = vxor.u32 %v1131, 2147483648
    %v1134 = vxor.u32 %v1132, 2147483648
    %v1135 = vmul.f32 %v1133, 1.442695
    %v1136 = vpow.pop %v1135
    %v1137 = vmul.f32 %v1134, 1.442695
    %v1138 = vpow.pop %v1137
    %v1139 = vadd.f32 %v1136, 1.0
    %v1140 = vadd.f32 %v1138, 1.0
    %v1141 = vrcp.pop %v1139
    %v1142 = vmul.f32 %v1139, %v1141
    %v1143 = vsub.f32 1.0, %v1142
    %v1144 = vmul.f32 %v1141, %v1143
    %v1145 = vadd.f32 %v1141, %v1144
    %vm1146 = vweird.f32 %v1139
    %vm1147 = vweird.f32 %v1141
    %vm1148 = vmor %vm1146, %vm1147
    %v1149 = vsel %vm1148, %v1141, %v1145
    %v1150 = vand.u32 2147483647, %v1139
    %vm1151 = vcmp.eq.f32.partialorder %v1150, 8.507059e+37
    %v1152 = vand.u32 %v1139, 2147483648
    %v1153 = vor.u32 1.1754944e-38, %v1152
    %v1154 = vsel %vm1151, %v1153, %v1149
    %v1155 = vmul.f32 1.0, %v1154
    %v1156 = vrcp.pop %v1140
    %v1157 = vmul.f32 %v1140, %v1156
    %v1158 = vsub.f32 1.0, %v1157
    %v1159 = vmul.f32 %v1156, %v1158
    %v1160 = vadd.f32 %v1156, %v1159
    %vm1161 = vweird.f32 %v1140
    %vm1162 = vweird.f32 %v1156
    %vm1163 = vmor %vm1161, %vm1162
    %v1164 = vsel %vm1163, %v1156, %v1160
    %v1165 = vand.u32 2147483647, %v1140
    %vm1166 = vcmp.eq.f32.partialorder %v1165, 8.507059e+37
    %v1167 = vand.u32 %v1140, 2147483648
    %v1168 = vor.u32 1.1754944e-38, %v1167
    %v1169 = vsel %vm1166, %v1168, %v1164
    %v1170 = vmul.f32 1.0, %v1169
    %v1171 = vmul.f32 %v1170, 2.0
    %v1172 = vsub.f32 %v1171, 1.0
    %1174 = vrot.lane.b32.xlu0 %v1078, 64
    %v1175 = vpop.permute.xlu0 %1174
    %v1177 = vmul.f32 %v1155, %v1175
    %v1178 = vmul.f32 %v1155, %v1172
    %1180 = vrot.lane.b32.xlu0 %v1178, 64
    %v1181 = vpop.permute.xlu0 %1180
    %v1183 = vadd.f32 %v1177, %v1181
    %v1184 = vtanh.pop %v1183
    %v1185 = vmul.f32 %v1170, %v1184
    %v1186 = vadd.f32 %v1085, %v1185
    %1188 = vrot.lane.b32.xlu0 %v1185, 64
    %v1189 = vpop.permute.xlu0 %1188
    %v1190 = vsel %vm208, %v1189, 0
    %1192 = vmatpush.msra.mxu0 0.0
    %1193 = vmatpush.msra.mxu0 0.0
    %1194 = vmatpush.msra.mxu0 0.0
    %1195 = vmatpush.msra.mxu0 0.0
    %1196 = vmatpush.msra.mxu0 0.0
    %1197 = vmatpush.msra.mxu0 0.0
    %1198 = vmatpush.msra.mxu0 0.0
    %1199 = vmatpush.msra.mxu0 0.0
    %1200 = vmatpush.msra.mxu0 %v1036
    %1201 = vmatpush.msra.mxu0 %v1034
    %1202 = vmatpush.msra.mxu0 %v1032
    %1203 = vmatpush.msra.mxu0 %v1030
    %1204 = vmatpush.msra.mxu0 %v1028
    %1205 = vmatpush.msra.mxu0 %v1026
    %1206 = vmatpush.msra.mxu0 %v1024
    %1207 = vmatpush.msra.mxu0 %v1022
    %1208 = vmatmul.f32.gmra.mxu0 %v1190
    %v1209 = vpop.f32.mrf.mxu0
    %v1210 = vadd.f32 0.0, %v1209
    %1211 = vdwg.mxu0
    %1212 = vmatpush.msra.mxu0 0.0
    %1213 = vmatpush.msra.mxu0 0.0
    %1214 = vmatpush.msra.mxu0 0.0
    %1215 = vmatpush.msra.mxu0 0.0
    %1216 = vmatpush.msra.mxu0 0.0
    %1217 = vmatpush.msra.mxu0 0.0
    %1218 = vmatpush.msra.mxu0 0.0
    %1219 = vmatpush.msra.mxu0 0.0
    %1220 = vmatpush.msra.mxu0 %v1037
    %1221 = vmatpush.msra.mxu0 %v1035
    %1222 = vmatpush.msra.mxu0 %v1033
    %1223 = vmatpush.msra.mxu0 %v1031
    %1224 = vmatpush.msra.mxu0 %v1029
    %1225 = vmatpush.msra.mxu0 %v1027
    %1226 = vmatpush.msra.mxu0 %v1025
    %1227 = vmatpush.msra.mxu0 %v1023
    %1228 = vmatmul.f32.gmra.mxu0 %v1190
    %v1229 = vpop.f32.mrf.mxu0
    %v1230 = vadd.f32 0.0, %v1229
    %1231 = vdwg.mxu0
    %v1232 = vadd.f32 %v964, %v1210
    %v1233 = vadd.f32 %v1005, %v1230
    %v1234 = vxor.u32 %v1232, 2147483648
    %v1235 = vxor.u32 %v1233, 2147483648
    %v1236 = vmul.f32 %v1234, 1.442695
    %v1237 = vpow.pop %v1236
    %v1238 = vmul.f32 %v1235, 1.442695
    %v1239 = vpow.pop %v1238
    %v1240 = vadd.f32 %v1237, 1.0
    %v1241 = vadd.f32 %v1239, 1.0
    %v1242 = vrcp.pop %v1240
    %v1243 = vmul.f32 %v1240, %v1242
    %v1244 = vsub.f32 1.0, %v1243
    %v1245 = vmul.f32 %v1242, %v1244
    %v1246 = vadd.f32 %v1242, %v1245
    %vm1247 = vweird.f32 %v1240
    %vm1248 = vweird.f32 %v1242
    %vm1249 = vmor %vm1247, %vm1248
    %v1250 = vsel %vm1249, %v1242, %v1246
    %v1251 = vand.u32 2147483647, %v1240
    %vm1252 = vcmp.eq.f32.partialorder %v1251, 8.507059e+37
    %v1253 = vand.u32 %v1240, 2147483648
    %v1254 = vor.u32 1.1754944e-38, %v1253
    %v1255 = vsel %vm1252, %v1254, %v1250
    %v1256 = vmul.f32 1.0, %v1255
    %v1257 = vrcp.pop %v1241
    %v1258 = vmul.f32 %v1241, %v1257
    %v1259 = vsub.f32 1.0, %v1258
    %v1260 = vmul.f32 %v1257, %v1259
    %v1261 = vadd.f32 %v1257, %v1260
    %vm1262 = vweird.f32 %v1241
    %vm1263 = vweird.f32 %v1257
    %vm1264 = vmor %vm1262, %vm1263
    %v1265 = vsel %vm1264, %v1257, %v1261
    %v1266 = vand.u32 2147483647, %v1241
    %vm1267 = vcmp.eq.f32.partialorder %v1266, 8.507059e+37
    %v1268 = vand.u32 %v1241, 2147483648
    %v1269 = vor.u32 1.1754944e-38, %v1268
    %v1270 = vsel %vm1267, %v1269, %v1265
    %v1271 = vmul.f32 1.0, %v1270
    %v1272 = vmul.f32 %v1271, 2.0
    %v1273 = vsub.f32 %v1272, 1.0
    %v1274 = vmul.f32 %v1256, %v1183
    %v1275 = vmul.f32 %v1256, %v1273
    %1277 = vrot.lane.b32.xlu0 %v1275, 64
    %v1278 = vpop.permute.xlu0 %1277
    %v1280 = vadd.f32 %v1274, %v1278
    %v1281 = vtanh.pop %v1280
    %v1282 = vmul.f32 %v1271, %v1281
    %v1283 = vadd.f32 %v1186, %v1282
    %1285 = vrot.lane.b32.xlu0 %v1282, 64
    %v1286 = vpop.permute.xlu0 %1285
    %v1287 = vsel %vm208, %v1286, 0
    %1289 = vmatpush.msra.mxu0 0.0
    %1290 = vmatpush.msra.mxu0 0.0
    %1291 = vmatpush.msra.mxu0 0.0
    %1292 = vmatpush.msra.mxu0 0.0
    %1293 = vmatpush.msra.mxu0 0.0
    %1294 = vmatpush.msra.mxu0 0.0
    %1295 = vmatpush.msra.mxu0 0.0
    %1296 = vmatpush.msra.mxu0 0.0
    %1297 = vmatpush.msra.mxu0 %v1036
    %1298 = vmatpush.msra.mxu0 %v1034
    %1299 = vmatpush.msra.mxu0 %v1032
    %1300 = vmatpush.msra.mxu0 %v1030
    %1301 = vmatpush.msra.mxu0 %v1028
    %1302 = vmatpush.msra.mxu0 %v1026
    %1303 = vmatpush.msra.mxu0 %v1024
    %1304 = vmatpush.msra.mxu0 %v1022
    %1305 = vmatmul.f32.gmra.mxu0 %v1287
    %v1306 = vpop.f32.mrf.mxu0
    %v1307 = vadd.f32 0.0, %v1306
    %1308 = vdwg.mxu0
    %1309 = vmatpush.msra.mxu0 0.0
    %1310 = vmatpush.msra.mxu0 0.0
    %1311 = vmatpush.msra.mxu0 0.0
    %1312 = vmatpush.msra.mxu0 0.0
    %1313 = vmatpush.msra.mxu0 0.0
    %1314 = vmatpush.msra.mxu0 0.0
    %1315 = vmatpush.msra.mxu0 0.0
    %1316 = vmatpush.msra.mxu0 0.0
    %1317 = vmatpush.msra.mxu0 %v1037
    %1318 = vmatpush.msra.mxu0 %v1035
    %1319 = vmatpush.msra.mxu0 %v1033
    %1320 = vmatpush.msra.mxu0 %v1031
    %1321 = vmatpush.msra.mxu0 %v1029
    %1322 = vmatpush.msra.mxu0 %v1027
    %1323 = vmatpush.msra.mxu0 %v1025
    %1324 = vmatpush.msra.mxu0 %v1023
    %1325 = vmatmul.f32.gmra.mxu0 %v1287
    %v1326 = vpop.f32.mrf.mxu0
    %v1327 = vadd.f32 0.0, %v1326
    %1328 = vdwg.mxu0
    %v1329 = vadd.f32 %v967, %v1307
    %v1330 = vadd.f32 %v1008, %v1327
    %v1331 = vxor.u32 %v1329, 2147483648
    %v1332 = vxor.u32 %v1330, 2147483648
    %v1333 = vmul.f32 %v1331, 1.442695
    %v1334 = vpow.pop %v1333
    %v1335 = vmul.f32 %v1332, 1.442695
    %v1336 = vpow.pop %v1335
    %v1337 = vadd.f32 %v1334, 1.0
    %v1338 = vadd.f32 %v1336, 1.0
    %v1339 = vrcp.pop %v1337
    %v1340 = vmul.f32 %v1337, %v1339
    %v1341 = vsub.f32 1.0, %v1340
    %v1342 = vmul.f32 %v1339, %v1341
    %v1343 = vadd.f32 %v1339, %v1342
    %vm1344 = vweird.f32 %v1337
    %vm1345 = vweird.f32 %v1339
    %vm1346 = vmor %vm1344, %vm1345
    %v1347 = vsel %vm1346, %v1339, %v1343
    %v1348 = vand.u32 2147483647, %v1337
    %vm1349 = vcmp.eq.f32.partialorder %v1348, 8.507059e+37
    %v1350 = vand.u32 %v1337, 2147483648
    %v1351 = vor.u32 1.1754944e-38, %v1350
    %v1352 = vsel %vm1349, %v1351, %v1347
    %v1353 = vmul.f32 1.0, %v1352
    %v1354 = vrcp.pop %v1338
    %v1355 = vmul.f32 %v1338, %v1354
    %v1356 = vsub.f32 1.0, %v1355
    %v1357 = vmul.f32 %v1354, %v1356
    %v1358 = vadd.f32 %v1354, %v1357
    %vm1359 = vweird.f32 %v1338
    %vm1360 = vweird.f32 %v1354
    %vm1361 = vmor %vm1359, %vm1360
    %v1362 = vsel %vm1361, %v1354, %v1358
    %v1363 = vand.u32 2147483647, %v1338
    %vm1364 = vcmp.eq.f32.partialorder %v1363, 8.507059e+37
    %v1365 = vand.u32 %v1338, 2147483648
    %v1366 = vor.u32 1.1754944e-38, %v1365
    %v1367 = vsel %vm1364, %v1366, %v1362
    %v1368 = vmul.f32 1.0, %v1367
    %v1369 = vmul.f32 %v1368, 2.0
    %v1370 = vsub.f32 %v1369, 1.0
    %v1371 = vmul.f32 %v1353, %v1280
    %v1372 = vmul.f32 %v1353, %v1370
    %1374 = vrot.lane.b32.xlu0 %v1372, 64
    %v1375 = vpop.permute.xlu0 %1374
    %v1377 = vadd.f32 %v1371, %v1375
    %v1378 = vtanh.pop %v1377
    %v1379 = vmul.f32 %v1368, %v1378
    %v1380 = vadd.f32 %v1283, %v1379
    %1382 = vrot.lane.b32.xlu0 %v1379, 64
    %v1383 = vpop.permute.xlu0 %1382
    %v1384 = vsel %vm208, %v1383, 0
    %1386 = vmatpush.msra.mxu0 0.0
    %1387 = vmatpush.msra.mxu0 0.0
    %1388 = vmatpush.msra.mxu0 0.0
    %1389 = vmatpush.msra.mxu0 0.0
    %1390 = vmatpush.msra.mxu0 0.0
    %1391 = vmatpush.msra.mxu0 0.0
    %1392 = vmatpush.msra.mxu0 0.0
    %1393 = vmatpush.msra.mxu0 0.0
    %1394 = vmatpush.msra.mxu0 %v1036
    %1395 = vmatpush.msra.mxu0 %v1034
    %1396 = vmatpush.msra.mxu0 %v1032
    %1397 = vmatpush.msra.mxu0 %v1030
    %1398 = vmatpush.msra.mxu0 %v1028
    %1399 = vmatpush.msra.mxu0 %v1026
    %1400 = vmatpush.msra.mxu0 %v1024
    %1401 = vmatpush.msra.mxu0 %v1022
    %1402 = vmatmul.f32.gmra.mxu0 %v1384
    %v1403 = vpop.f32.mrf.mxu0
    %v1404 = vadd.f32 0.0, %v1403
    %1405 = vdwg.mxu0
    %1406 = vmatpush.msra.mxu0 0.0
    %1407 = vmatpush.msra.mxu0 0.0
    %1408 = vmatpush.msra.mxu0 0.0
    %1409 = vmatpush.msra.mxu0 0.0
    %1410 = vmatpush.msra.mxu0 0.0
    %1411 = vmatpush.msra.mxu0 0.0
    %1412 = vmatpush.msra.mxu0 0.0
    %1413 = vmatpush.msra.mxu0 0.0
    %1414 = vmatpush.msra.mxu0 %v1037
    %1415 = vmatpush.msra.mxu0 %v1035
    %1416 = vmatpush.msra.mxu0 %v1033
    %1417 = vmatpush.msra.mxu0 %v1031
    %1418 = vmatpush.msra.mxu0 %v1029
    %1419 = vmatpush.msra.mxu0 %v1027
    %1420 = vmatpush.msra.mxu0 %v1025
    %1421 = vmatpush.msra.mxu0 %v1023
    %1422 = vmatmul.f32.gmra.mxu0 %v1384
    %v1423 = vpop.f32.mrf.mxu0
    %v1424 = vadd.f32 0.0, %v1423
    %1425 = vdwg.mxu0
    %v1426 = vadd.f32 %v970, %v1404
    %v1427 = vadd.f32 %v1011, %v1424
    %v1428 = vxor.u32 %v1426, 2147483648
    %v1429 = vxor.u32 %v1427, 2147483648
    %v1430 = vmul.f32 %v1428, 1.442695
    %v1431 = vpow.pop %v1430
    %v1432 = vmul.f32 %v1429, 1.442695
    %v1433 = vpow.pop %v1432
    %v1434 = vadd.f32 %v1431, 1.0
    %v1435 = vadd.f32 %v1433, 1.0
    %v1436 = vrcp.pop %v1434
    %v1437 = vmul.f32 %v1434, %v1436
    %v1438 = vsub.f32 1.0, %v1437
    %v1439 = vmul.f32 %v1436, %v1438
    %v1440 = vadd.f32 %v1436, %v1439
    %vm1441 = vweird.f32 %v1434
    %vm1442 = vweird.f32 %v1436
    %vm1443 = vmor %vm1441, %vm1442
    %v1444 = vsel %vm1443, %v1436, %v1440
    %v1445 = vand.u32 2147483647, %v1434
    %vm1446 = vcmp.eq.f32.partialorder %v1445, 8.507059e+37
    %v1447 = vand.u32 %v1434, 2147483648
    %v1448 = vor.u32 1.1754944e-38, %v1447
    %v1449 = vsel %vm1446, %v1448, %v1444
    %v1450 = vmul.f32 1.0, %v1449
    %v1451 = vrcp.pop %v1435
    %v1452 = vmul.f32 %v1435, %v1451
    %v1453 = vsub.f32 1.0, %v1452
    %v1454 = vmul.f32 %v1451, %v1453
    %v1455 = vadd.f32 %v1451, %v1454
    %vm1456 = vweird.f32 %v1435
    %vm1457 = vweird.f32 %v1451
    %vm1458 = vmor %vm1456, %vm1457
    %v1459 = vsel %vm1458, %v1451, %v1455
    %v1460 = vand.u32 2147483647, %v1435
    %vm1461 = vcmp.eq.f32.partialorder %v1460, 8.507059e+37
    %v1462 = vand.u32 %v1435, 2147483648
    %v1463 = vor.u32 1.1754944e-38, %v1462
    %v1464 = vsel %vm1461, %v1463, %v1459
    %v1465 = vmul.f32 1.0, %v1464
    %v1466 = vmul.f32 %v1465, 2.0
    %v1467 = vsub.f32 %v1466, 1.0
    %v1468 = vmul.f32 %v1450, %v1377
    %v1469 = vmul.f32 %v1450, %v1467
    %1471 = vrot.lane.b32.xlu0 %v1469, 64
    %v1472 = vpop.permute.xlu0 %1471
    %v1474 = vadd.f32 %v1468, %v1472
    %v1475 = vtanh.pop %v1474
    %v1476 = vmul.f32 %v1465, %v1475
    %v1477 = vadd.f32 %v1380, %v1476
    %1479 = vrot.lane.b32.xlu0 %v1476, 64
    %v1480 = vpop.permute.xlu0 %1479
    %v1481 = vsel %vm208, %v1480, 0
    %1483 = vmatpush.msra.mxu0 0.0
    %1484 = vmatpush.msra.mxu0 0.0
    %1485 = vmatpush.msra.mxu0 0.0
    %1486 = vmatpush.msra.mxu0 0.0
    %1487 = vmatpush.msra.mxu0 0.0
    %1488 = vmatpush.msra.mxu0 0.0
    %1489 = vmatpush.msra.mxu0 0.0
    %1490 = vmatpush.msra.mxu0 0.0
    %1491 = vmatpush.msra.mxu0 %v1036
    %1492 = vmatpush.msra.mxu0 %v1034
    %1493 = vmatpush.msra.mxu0 %v1032
    %1494 = vmatpush.msra.mxu0 %v1030
    %1495 = vmatpush.msra.mxu0 %v1028
    %1496 = vmatpush.msra.mxu0 %v1026
    %1497 = vmatpush.msra.mxu0 %v1024
    %1498 = vmatpush.msra.mxu0 %v1022
    %1499 = vmatmul.f32.gmra.mxu0 %v1481
    %v1500 = vpop.f32.mrf.mxu0
    %v1501 = vadd.f32 0.0, %v1500
    %1502 = vdwg.mxu0
    %1503 = vmatpush.msra.mxu0 0.0
    %1504 = vmatpush.msra.mxu0 0.0
    %1505 = vmatpush.msra.mxu0 0.0
    %1506 = vmatpush.msra.mxu0 0.0
    %1507 = vmatpush.msra.mxu0 0.0
    %1508 = vmatpush.msra.mxu0 0.0
    %1509 = vmatpush.msra.mxu0 0.0
    %1510 = vmatpush.msra.mxu0 0.0
    %1511 = vmatpush.msra.mxu0 %v1037
    %1512 = vmatpush.msra.mxu0 %v1035
    %1513 = vmatpush.msra.mxu0 %v1033
    %1514 = vmatpush.msra.mxu0 %v1031
    %1515 = vmatpush.msra.mxu0 %v1029
    %1516 = vmatpush.msra.mxu0 %v1027
    %1517 = vmatpush.msra.mxu0 %v1025
    %1518 = vmatpush.msra.mxu0 %v1023
    %1519 = vmatmul.f32.gmra.mxu0 %v1481
    %v1520 = vpop.f32.mrf.mxu0
    %v1521 = vadd.f32 0.0, %v1520
    %1522 = vdwg.mxu0
    %v1523 = vadd.f32 %v973, %v1501
    %v1524 = vadd.f32 %v1014, %v1521
    %v1525 = vxor.u32 %v1523, 2147483648
    %v1526 = vxor.u32 %v1524, 2147483648
    %v1527 = vmul.f32 %v1525, 1.442695
    %v1528 = vpow.pop %v1527
    %v1529 = vmul.f32 %v1526, 1.442695
    %v1530 = vpow.pop %v1529
    %v1531 = vadd.f32 %v1528, 1.0
    %v1532 = vadd.f32 %v1530, 1.0
    %v1533 = vrcp.pop %v1531
    %v1534 = vmul.f32 %v1531, %v1533
    %v1535 = vsub.f32 1.0, %v1534
    %v1536 = vmul.f32 %v1533, %v1535
    %v1537 = vadd.f32 %v1533, %v1536
    %vm1538 = vweird.f32 %v1531
    %vm1539 = vweird.f32 %v1533
    %vm1540 = vmor %vm1538, %vm1539
    %v1541 = vsel %vm1540, %v1533, %v1537
    %v1542 = vand.u32 2147483647, %v1531
    %vm1543 = vcmp.eq.f32.partialorder %v1542, 8.507059e+37
    %v1544 = vand.u32 %v1531, 2147483648
    %v1545 = vor.u32 1.1754944e-38, %v1544
    %v1546 = vsel %vm1543, %v1545, %v1541
    %v1547 = vmul.f32 1.0, %v1546
    %v1548 = vrcp.pop %v1532
    %v1549 = vmul.f32 %v1532, %v1548
    %v1550 = vsub.f32 1.0, %v1549
    %v1551 = vmul.f32 %v1548, %v1550
    %v1552 = vadd.f32 %v1548, %v1551
    %vm1553 = vweird.f32 %v1532
    %vm1554 = vweird.f32 %v1548
    %vm1555 = vmor %vm1553, %vm1554
    %v1556 = vsel %vm1555, %v1548, %v1552
    %v1557 = vand.u32 2147483647, %v1532
    %vm1558 = vcmp.eq.f32.partialorder %v1557, 8.507059e+37
    %v1559 = vand.u32 %v1532, 2147483648
    %v1560 = vor.u32 1.1754944e-38, %v1559
    %v1561 = vsel %vm1558, %v1560, %v1556
    %v1562 = vmul.f32 1.0, %v1561
    %v1563 = vmul.f32 %v1562, 2.0
    %v1564 = vsub.f32 %v1563, 1.0
    %v1565 = vmul.f32 %v1547, %v1474
    %v1566 = vmul.f32 %v1547, %v1564
    %1568 = vrot.lane.b32.xlu0 %v1566, 64
    %v1569 = vpop.permute.xlu0 %1568
    %v1571 = vadd.f32 %v1565, %v1569
    %v1572 = vtanh.pop %v1571
    %v1573 = vmul.f32 %v1562, %v1572
    %v1574 = vadd.f32 %v1477, %v1573
    %1576 = vrot.lane.b32.xlu0 %v1573, 64
    %v1577 = vpop.permute.xlu0 %1576
    %v1578 = vsel %vm208, %v1577, 0
    %1580 = vmatpush.msra.mxu0 0.0
    %1581 = vmatpush.msra.mxu0 0.0
    %1582 = vmatpush.msra.mxu0 0.0
    %1583 = vmatpush.msra.mxu0 0.0
    %1584 = vmatpush.msra.mxu0 0.0
    %1585 = vmatpush.msra.mxu0 0.0
    %1586 = vmatpush.msra.mxu0 0.0
    %1587 = vmatpush.msra.mxu0 0.0
    %1588 = vmatpush.msra.mxu0 %v1036
    %1589 = vmatpush.msra.mxu0 %v1034
    %1590 = vmatpush.msra.mxu0 %v1032
    %1591 = vmatpush.msra.mxu0 %v1030
    %1592 = vmatpush.msra.mxu0 %v1028
    %1593 = vmatpush.msra.mxu0 %v1026
    %1594 = vmatpush.msra.mxu0 %v1024
    %1595 = vmatpush.msra.mxu0 %v1022
    %1596 = vmatmul.f32.gmra.mxu0 %v1578
    %v1597 = vpop.f32.mrf.mxu0
    %v1598 = vadd.f32 0.0, %v1597
    %1599 = vdwg.mxu0
    %1600 = vmatpush.msra.mxu0 0.0
    %1601 = vmatpush.msra.mxu0 0.0
    %1602 = vmatpush.msra.mxu0 0.0
    %1603 = vmatpush.msra.mxu0 0.0
    %1604 = vmatpush.msra.mxu0 0.0
    %1605 = vmatpush.msra.mxu0 0.0
    %1606 = vmatpush.msra.mxu0 0.0
    %1607 = vmatpush.msra.mxu0 0.0
    %1608 = vmatpush.msra.mxu0 %v1037
    %1609 = vmatpush.msra.mxu0 %v1035
    %1610 = vmatpush.msra.mxu0 %v1033
    %1611 = vmatpush.msra.mxu0 %v1031
    %1612 = vmatpush.msra.mxu0 %v1029
    %1613 = vmatpush.msra.mxu0 %v1027
    %1614 = vmatpush.msra.mxu0 %v1025
    %1615 = vmatpush.msra.mxu0 %v1023
    %1616 = vmatmul.f32.gmra.mxu0 %v1578
    %v1617 = vpop.f32.mrf.mxu0
    %v1618 = vadd.f32 0.0, %v1617
    %1619 = vdwg.mxu0
    %v1620 = vadd.f32 %v976, %v1598
    %v1621 = vadd.f32 %v1017, %v1618
    %v1622 = vxor.u32 %v1620, 2147483648
    %v1623 = vxor.u32 %v1621, 2147483648
    %v1624 = vmul.f32 %v1622, 1.442695
    %v1625 = vpow.pop %v1624
    %v1626 = vmul.f32 %v1623, 1.442695
    %v1627 = vpow.pop %v1626
    %v1628 = vadd.f32 %v1625, 1.0
    %v1629 = vadd.f32 %v1627, 1.0
    %v1630 = vrcp.pop %v1628
    %v1631 = vmul.f32 %v1628, %v1630
    %v1632 = vsub.f32 1.0, %v1631
    %v1633 = vmul.f32 %v1630, %v1632
    %v1634 = vadd.f32 %v1630, %v1633
    %vm1635 = vweird.f32 %v1628
    %vm1636 = vweird.f32 %v1630
    %vm1637 = vmor %vm1635, %vm1636
    %v1638 = vsel %vm1637, %v1630, %v1634
    %v1639 = vand.u32 2147483647, %v1628
    %vm1640 = vcmp.eq.f32.partialorder %v1639, 8.507059e+37
    %v1641 = vand.u32 %v1628, 2147483648
    %v1642 = vor.u32 1.1754944e-38, %v1641
    %v1643 = vsel %vm1640, %v1642, %v1638
    %v1644 = vmul.f32 1.0, %v1643
    %v1645 = vrcp.pop %v1629
    %v1646 = vmul.f32 %v1629, %v1645
    %v1647 = vsub.f32 1.0, %v1646
    %v1648 = vmul.f32 %v1645, %v1647
    %v1649 = vadd.f32 %v1645, %v1648
    %vm1650 = vweird.f32 %v1629
    %vm1651 = vweird.f32 %v1645
    %vm1652 = vmor %vm1650, %vm1651
    %v1653 = vsel %vm1652, %v1645, %v1649
    %v1654 = vand.u32 2147483647, %v1629
    %vm1655 = vcmp.eq.f32.partialorder %v1654, 8.507059e+37
    %v1656 = vand.u32 %v1629, 2147483648
    %v1657 = vor.u32 1.1754944e-38, %v1656
    %v1658 = vsel %vm1655, %v1657, %v1653
    %v1659 = vmul.f32 1.0, %v1658
    %v1660 = vmul.f32 %v1659, 2.0
    %v1661 = vsub.f32 %v1660, 1.0
    %v1662 = vmul.f32 %v1644, %v1571
    %v1663 = vmul.f32 %v1644, %v1661
    %1665 = vrot.lane.b32.xlu0 %v1663, 64
    %v1666 = vpop.permute.xlu0 %1665
    %v1668 = vadd.f32 %v1662, %v1666
    %v1669 = vtanh.pop %v1668
    %v1670 = vmul.f32 %v1659, %v1669
    %v1671 = vadd.f32 %v1574, %v1670
    %1673 = vrot.lane.b32.xlu0 %v1670, 64
    %v1674 = vpop.permute.xlu0 %1673
    %v1675 = vsel %vm208, %v1674, 0
    %1677 = vmatpush.msra.mxu0 0.0
    %1678 = vmatpush.msra.mxu0 0.0
    %1679 = vmatpush.msra.mxu0 0.0
    %1680 = vmatpush.msra.mxu0 0.0
    %1681 = vmatpush.msra.mxu0 0.0
    %1682 = vmatpush.msra.mxu0 0.0
    %1683 = vmatpush.msra.mxu0 0.0
    %1684 = vmatpush.msra.mxu0 0.0
    %1685 = vmatpush.msra.mxu0 %v1036
    %1686 = vmatpush.msra.mxu0 %v1034
    %1687 = vmatpush.msra.mxu0 %v1032
    %1688 = vmatpush.msra.mxu0 %v1030
    %1689 = vmatpush.msra.mxu0 %v1028
    %1690 = vmatpush.msra.mxu0 %v1026
    %1691 = vmatpush.msra.mxu0 %v1024
    %1692 = vmatpush.msra.mxu0 %v1022
    %1693 = vmatmul.f32.gmra.mxu0 %v1675
    %v1694 = vpop.f32.mrf.mxu0
    %v1695 = vadd.f32 0.0, %v1694
    %1696 = vdwg.mxu0
    %1697 = vmatpush.msra.mxu0 0.0
    %1698 = vmatpush.msra.mxu0 0.0
    %1699 = vmatpush.msra.mxu0 0.0
    %1700 = vmatpush.msra.mxu0 0.0
    %1701 = vmatpush.msra.mxu0 0.0
    %1702 = vmatpush.msra.mxu0 0.0
    %1703 = vmatpush.msra.mxu0 0.0
    %1704 = vmatpush.msra.mxu0 0.0
    %1705 = vmatpush.msra.mxu0 %v1037
    %1706 = vmatpush.msra.mxu0 %v1035
    %1707 = vmatpush.msra.mxu0 %v1033
    %1708 = vmatpush.msra.mxu0 %v1031
    %1709 = vmatpush.msra.mxu0 %v1029
    %1710 = vmatpush.msra.mxu0 %v1027
    %1711 = vmatpush.msra.mxu0 %v1025
    %1712 = vmatpush.msra.mxu0 %v1023
    %1713 = vmatmul.f32.gmra.mxu0 %v1675
    %v1714 = vpop.f32.mrf.mxu0
    %v1715 = vadd.f32 0.0, %v1714
    %1716 = vdwg.mxu0
    %v1717 = vadd.f32 %v979, %v1695
    %v1718 = vadd.f32 %v1020, %v1715
    %v1719 = vxor.u32 %v1717, 2147483648
    %v1720 = vxor.u32 %v1718, 2147483648
    %v1721 = vmul.f32 %v1719, 1.442695
    %v1722 = vpow.pop %v1721
    %v1723 = vmul.f32 %v1720, 1.442695
    %v1724 = vpow.pop %v1723
    %v1725 = vadd.f32 %v1722, 1.0
    %v1726 = vadd.f32 %v1724, 1.0
    %v1727 = vrcp.pop %v1725
    %v1728 = vmul.f32 %v1725, %v1727
    %v1729 = vsub.f32 1.0, %v1728
    %v1730 = vmul.f32 %v1727, %v1729
    %v1731 = vadd.f32 %v1727, %v1730
    %vm1732 = vweird.f32 %v1725
    %vm1733 = vweird.f32 %v1727
    %vm1734 = vmor %vm1732, %vm1733
    %v1735 = vsel %vm1734, %v1727, %v1731
    %v1736 = vand.u32 2147483647, %v1725
    %vm1737 = vcmp.eq.f32.partialorder %v1736, 8.507059e+37
    %v1738 = vand.u32 %v1725, 2147483648
    %v1739 = vor.u32 1.1754944e-38, %v1738
    %v1740 = vsel %vm1737, %v1739, %v1735
    %v1741 = vmul.f32 1.0, %v1740
    %v1742 = vrcp.pop %v1726
    %v1743 = vmul.f32 %v1726, %v1742
    %v1744 = vsub.f32 1.0, %v1743
    %v1745 = vmul.f32 %v1742, %v1744
    %v1746 = vadd.f32 %v1742, %v1745
    %vm1747 = vweird.f32 %v1726
    %vm1748 = vweird.f32 %v1742
    %vm1749 = vmor %vm1747, %vm1748
    %v1750 = vsel %vm1749, %v1742, %v1746
    %v1751 = vand.u32 2147483647, %v1726
    %vm1752 = vcmp.eq.f32.partialorder %v1751, 8.507059e+37
    %v1753 = vand.u32 %v1726, 2147483648
    %v1754 = vor.u32 1.1754944e-38, %v1753
    %v1755 = vsel %vm1752, %v1754, %v1750
    %v1756 = vmul.f32 1.0, %v1755
    %v1757 = vmul.f32 %v1756, 2.0
    %v1758 = vsub.f32 %v1757, 1.0
    %v1759 = vmul.f32 %v1741, %v1668
    %v1760 = vmul.f32 %v1741, %v1758
    %1762 = vrot.lane.b32.xlu0 %v1760, 64
    %v1763 = vpop.permute.xlu0 %1762
    %v1765 = vadd.f32 %v1759, %v1763
    %v1766 = vtanh.pop %v1765
    %v1767 = vmul.f32 %v1756, %v1766
    %v1768 = vadd.f32 %v1671, %v1767
    %1770 = vrot.lane.b32.xlu0 %v1768, 96
    %v1771 = vpop.permute.xlu0 %1770
    %v1773 = vadd.f32 %v1768, %v1771
    %v1774 = vmul.f32 %v1773, 0.0625
    %1776 = vrot.lane.b32.xlu0 %v1774, 64
    %v1777 = vpop.permute.xlu0 %1776
    %1779 = vst.msk [vmem:[#allocation2] sm:$0xff] %vm51, %v1777
    // Predicated region
    $region10: #{shared_lstm_encoder.1} parent=1 // pred_check
      _
    $region11: #{shared_lstm_encoder.1} parent=1 // pred_check_branch
      %1781 = sbr.rel (0) target = $region13
    $region12: #{shared_lstm_encoder.1} parent=1 // pred_region
      %1783 = vsyncadd [#allocation3], 0
      %s1785 = sshll.u32 [#allocation2], 4
      %s1786 = int_to_ptr.vmem [resolvable:$true] %s1785
      %s1787 = sshll.u32 %s2, 4
      %s1788 = int_to_ptr.hbm [resolvable:$true] %s1787
      %1790 = dma.vmem_to_hbm [thread:$0]  %s1786, 128, %s1788, [#allocation3]
    $region13: #{shared_lstm_encoder.1} parent=1 // pred_fallthru
      _
    // Predicated region
    $region14: #{shared_lstm_encoder.1} parent=1 // pred_check
      _
    $region15: #{shared_lstm_encoder.1} parent=1 // pred_check_branch
      %1792 = sbr.rel (0) target = $region17
    $region16: #{shared_lstm_encoder.1} parent=1 // pred_region
      %1794 = dma.done [#allocation3], 128
    $region17: #{shared_lstm_encoder.1} parent=1 // pred_fallthru
      _
    %1795 = vsyncpa [#allocation3], 1

</llo_original>
